<compile_context>
chip_gen: v7x
topology: tpu7x:2x2x1
jax: 0.10.0
libtpu: 0.0.40
codegen_flags: <defaults>
</compile_context>

<pallas_src>
import jax
import jax.numpy as jnp
from jax.experimental import pallas as pl
from jax.experimental.pallas import tpu as pltpu


# ---------------- kernel A: embedding DMA gather + LSTM single step ----------

def _make_lstm_step_kernel(num_layers, hidden_dim, batch):
    L, H, B = num_layers, hidden_dim, batch

    def kernel(*refs):
        ids_ref = refs[0]                            # (B,)      int32  SMEM
        emb_ref = refs[1]                            # (V, E)    f32    HBM
        w_ih_refs = refs[2:2 + L]                    # (In_l,4H) bf16   VMEM
        w_hh_refs = refs[2 + L:2 + 2 * L]            # (H, 4H)   bf16   VMEM
        b_refs = refs[2 + 2 * L:2 + 3 * L]           # (1, 4H)   f32    VMEM
        h_in_ref = refs[2 + 3 * L]                   # (L, B, H) f32
        c_in_ref = refs[3 + 3 * L]                   # (L, B, H) f32
        h_last_ref = refs[4 + 3 * L]                 # (B, H)    bf16   out
        h_out_ref = refs[5 + 3 * L]                  # (L, B, H) f32    out
        c_out_ref = refs[6 + 3 * L]                  # (L, B, H) f32    out
        x_scr = refs[7 + 3 * L]                      # (B, E)    f32    scratch
        sem = refs[8 + 3 * L]                        # (B,)      DMA sems

        # ---- embedding row gather: B small DMAs HBM -> VMEM ----------------
        # (padding_idx row is zero in the table, so padding tokens embed to 0
        # exactly like nn.Embedding; out-of-range ids are the caller's duty.)
        copies = []
        for b in range(B):
            cp = pltpu.make_async_copy(
                emb_ref.at[pl.ds(ids_ref[b], 1), :],
                x_scr.at[pl.ds(b, 1), :],
                sem.at[b])
            cp.start()
            copies.append(cp)
        for cp in copies:
            cp.wait()

        # dropout(embedding) is identity in eval mode.
        x = x_scr[...].astype(jnp.bfloat16)          # (B, E)

        for layer in range(L):
            h_prev = h_in_ref[layer]                 # (B, H) f32
            c_prev = c_in_ref[layer]                 # (B, H) f32
            gates = (
                jnp.dot(x, w_ih_refs[layer][...],
                        preferred_element_type=jnp.float32)
                + jnp.dot(h_prev.astype(jnp.bfloat16), w_hh_refs[layer][...],
                          preferred_element_type=jnp.float32)
                + b_refs[layer][...])                # (B, 4H) f32
            # PyTorch gate order: i, f, g, o
            i_g = jax.nn.sigmoid(gates[:, 0 * H:1 * H])
            f_g = jax.nn.sigmoid(gates[:, 1 * H:2 * H])
            g_g = jnp.tanh(gates[:, 2 * H:3 * H])
            o_g = jax.nn.sigmoid(gates[:, 3 * H:4 * H])

            c_new = f_g * c_prev + i_g * g_g
            h_new = o_g * jnp.tanh(c_new)

            h_out_ref[layer] = h_new
            c_out_ref[layer] = c_new
            x = h_new.astype(jnp.bfloat16)           # inter-layer dropout = id

        h_last_ref[...] = x

    return kernel


def _lstm_step(packed, ids, hidden, cell):
    L, B, H = hidden.shape
    V, E = packed["embedding"].shape

    vmem_spec = pl.BlockSpec(memory_space=pltpu.MemorySpace.VMEM)
    smem_spec = pl.BlockSpec(memory_space=pltpu.MemorySpace.SMEM)
    any_spec = pl.BlockSpec(memory_space=pl.ANY)

    in_specs = ([smem_spec, any_spec]
                + [vmem_spec] * (3 * L)
                + [vmem_spec, vmem_spec])
    out_specs = (vmem_spec, vmem_spec, vmem_spec)
    out_shape = (jax.ShapeDtypeStruct((B, H), jnp.bfloat16),
                 jax.ShapeDtypeStruct((L, B, H), jnp.float32),
                 jax.ShapeDtypeStruct((L, B, H), jnp.float32))

    weight_bytes = (
        sum(int(w.size) * w.dtype.itemsize for w in packed["w_ih_t"])
        + sum(int(w.size) * w.dtype.itemsize for w in packed["w_hh_t"])
        + sum(int(b.size) * b.dtype.itemsize for b in packed["b_cat"]))
    state_bytes = 4 * (L * B * H * 4)            # h_in, c_in, h_out, c_out
    scratch_bytes = B * E * 4
    out_small = B * H * 2

    flops = 0
    for l in range(L):
        in_dim = E if l == 0 else H
        flops += 2 * B * (in_dim + H) * 4 * H
    cost = pl.CostEstimate(
        flops=flops,
        transcendentals=5 * L * B * H,
        bytes_accessed=(weight_bytes + state_bytes + scratch_bytes
                        + out_small + B * E * 4 + B * 4))

    vmem_needed = weight_bytes + state_bytes + scratch_bytes + out_small
    vmem_limit = int(min(100 * 2 ** 20, max(32 * 2 ** 20, 2 * vmem_needed)))

    return pl.pallas_call(
        _make_lstm_step_kernel(L, H, B),
        out_shape=out_shape,
        in_specs=in_specs,
        out_specs=out_specs,
        scratch_shapes=[pltpu.VMEM((B, E), jnp.float32),
                        pltpu.SemaphoreType.DMA((B,))],
        compiler_params=pltpu.CompilerParams(vmem_limit_bytes=vmem_limit),
        cost_estimate=cost,
    )(ids.reshape(B).astype(jnp.int32), packed["embedding"],
      *packed["w_ih_t"], *packed["w_hh_t"], *packed["b_cat"],
      hidden, cell)


# ---------------- kernel B: vocab-tiled FC projection (parallel grid) --------

def _fc_kernel(h_ref, w_ref, b_ref, o_ref):
    o_ref[...] = (jnp.dot(h_ref[...], w_ref[...],
                          preferred_element_type=jnp.float32)
                  + b_ref[...])


def _fc_project(packed, h_last, *, tile_v=None):
    B, H = h_last.shape
    Hw, V = packed["w_fc_t"].shape
    assert Hw == H

    if tile_v is None:
        tile_v = V
        for cand in (8192, 4096, 2048, 1024, 512, 256, 128):
            if V % cand == 0:
                tile_v = cand
                break
    assert tile_v == V or (tile_v % 128 == 0 and V % tile_v == 0)
    num_tiles = V // tile_v

    wbytes = packed["w_fc_t"].dtype.itemsize
    cost = pl.CostEstimate(
        flops=2 * B * H * V,
        transcendentals=0,
        bytes_accessed=H * V * wbytes + V * 4 + B * V * 4 + B * H * 2)

    vmem_needed = (2 * H * tile_v * wbytes      # streamed weight (dbl-buffer)
                   + 2 * tile_v * 4             # streamed bias
                   + 2 * B * tile_v * 4         # output tiles
                   + 2 * B * H * 2)             # resident h_last
    vmem_limit = int(min(100 * 2 ** 20, max(32 * 2 ** 20, 2 * vmem_needed)))

    return pl.pallas_call(
        _fc_kernel,
        out_shape=jax.ShapeDtypeStruct((B, V), jnp.float32),
        grid=(num_tiles,),
        in_specs=[pl.BlockSpec((B, H), lambda v: (0, 0)),
                  pl.BlockSpec((H, tile_v), lambda v: (0, v)),
                  pl.BlockSpec((1, tile_v), lambda v: (0, v))],
        out_specs=pl.BlockSpec((B, tile_v), lambda v: (0, v)),
        compiler_params=pltpu.CompilerParams(
            dimension_semantics=("parallel",),   # vocab tiles are independent
            vmem_limit_bytes=vmem_limit),
        cost_estimate=cost,
    )(h_last, packed["w_fc_t"], packed["b_fc2"])


# ----------------------------- wrapper ---------------------------------------

def decoder_forward(packed, x_ids, hidden, cell, *, tile_v=None):
    """Mirrors Decoder.forward (eval mode, single time step).

    packed: output of pack_decoder_params (weights already in kernel layout)
    x_ids:  (B,) int32 token ids
    hidden: (num_layers, B, H);  cell: (num_layers, B, H)
    Returns (pred (B, V), new_hidden (L, B, H), new_cell (L, B, H)).
    """
    h_last, new_h, new_c = _lstm_step(packed, x_ids, hidden, cell)
    pred = _fc_project(packed, h_last, tile_v=tile_v)
    return pred, new_h, new_c


# ----------------------------- parameter packing -----------------------------

def pack_decoder_params(params, weight_dtype=jnp.bfloat16):
    """One-time conversion from PyTorch layout to kernel layout.

    Matrix weights are stored transposed and (by default) in bf16 so the
    dominant W_fc HBM stream is halved; accumulation stays f32 on the MXU.
    """
    L = len(params["w_ih"])
    w_ih_t, w_hh_t, b_cat = [], [], []
    for l in range(L):
        w_ih_t.append(params["w_ih"][l].T.astype(weight_dtype))   # (In_l, 4H)
        w_hh_t.append(params["w_hh"][l].T.astype(weight_dtype))   # (H, 4H)
        b_cat.append((params["b_ih"][l] + params["b_hh"][l])
                     .reshape(1, -1).astype(jnp.float32))          # (1, 4H)
    return {
        "embedding": params["embedding"].astype(jnp.float32),      # (V, E)
        "w_ih_t": w_ih_t,
        "w_hh_t": w_hh_t,
        "b_cat": b_cat,
        "w_fc_t": params["w_fc"].T.astype(weight_dtype),           # (H, V)
        "b_fc2": params["b_fc"].reshape(1, -1).astype(jnp.float32),
    }


# ----------------------------- reference (pure JAX, f32) ----------------------

def decoder_forward_ref(params, x_ids, hidden, cell):
    emb = params["embedding"][x_ids]
    layer_in = emb
    new_h, new_c = [], []
    H = hidden.shape[-1]
    for layer in range(len(params["w_ih"])):
        gates = (layer_in @ params["w_ih"][layer].T
                 + hidden[layer] @ params["w_hh"][layer].T
                 + params["b_ih"][layer] + params["b_hh"][layer])
        i_g = jax.nn.sigmoid(gates[:, 0 * H:1 * H])
        f_g = jax.nn.sigmoid(gates[:, 1 * H:2 * H])
        g_g = jnp.tanh(gates[:, 2 * H:3 * H])
        o_g = jax.nn.sigmoid(gates[:, 3 * H:4 * H])
        c_l = f_g * cell[layer] + i_g * g_g
        h_l = o_g * jnp.tanh(c_l)
        new_h.append(h_l)
        new_c.append(c_l)
        layer_in = h_l
    pred = layer_in @ params["w_fc"].T + params["b_fc"]
    return pred, jnp.stack(new_h, 0), jnp.stack(new_c, 0)


# ----------------------------- parameter init ---------------------------------

def init_params(key, output_size, embedding_dim, hidden_dim, num_layers,
                padding_idx):
    keys = jax.random.split(key, 3 + num_layers)
    k_emb, k_wfc, k_bfc = keys[0], keys[1], keys[2]
    lkeys = keys[3:]

    emb = 0.05 * jax.random.normal(k_emb, (output_size, embedding_dim),
                                   jnp.float32)
    emb = emb.at[padding_idx].set(0.0)  # padding_idx row zeroed (PyTorch)

    w_ih, w_hh, b_ih, b_hh = [], [], [], []
    for layer in range(num_layers):
        in_dim = embedding_dim if layer == 0 else hidden_dim
        k0, k1, k2, k3 = jax.random.split(lkeys[layer], 4)
        scale = 1.0 / jnp.sqrt(hidden_dim)
        w_ih.append(scale * jax.random.normal(k0, (4 * hidden_dim, in_dim),
                                              jnp.float32))
        w_hh.append(scale * jax.random.normal(k1, (4 * hidden_dim, hidden_dim),
                                              jnp.float32))
        b_ih.append(scale * jax.random.normal(k2, (4 * hidden_dim,),
                                              jnp.float32))
        b_hh.append(scale * jax.random.normal(k3, (4 * hidden_dim,),
                                              jnp.float32))

    w_fc = (1.0 / jnp.sqrt(hidden_dim)) * jax.random.normal(
        k_wfc, (output_size, hidden_dim), jnp.float32)
    b_fc = 0.01 * jax.random.normal(k_bfc, (output_size,), jnp.float32)

    return {
        "embedding": emb,
        "w_ih": w_ih, "w_hh": w_hh, "b_ih": b_ih, "b_hh": b_hh,
        "w_fc": w_fc, "b_fc": b_fc,
    }


# ----------------------------- main --------------------------------------------

if __name__ == "__main__":
    # Small, TPU-friendly shapes (feature dims multiples of 128, batch mult. 8).
    output_size = 256      # vocab size
    embedding_dim = 128
    hidden_dim = 128
    num_layers = 2
    padding_idx = 0
    batch = 8
    tile_v = 128           # 2 vocab tiles -> exercises the parallel FC grid

    key = jax.random.PRNGKey(0)
    k_params, k_x, k_h, k_c = jax.random.split(key, 4)

    params = init_params(k_params, output_size, embedding_dim, hidden_dim,
                         num_layers, padding_idx)
    packed = pack_decoder_params(params)   # one-time repack (bf16 weights)

    x_ids = jax.random.randint(k_x, (batch,), 0, output_size, dtype=jnp.int32)
    hidden = 0.1 * jax.random.normal(k_h, (num_layers, batch, hidden_dim),
                                     jnp.float32)
    cell = 0.1 * jax.random.normal(k_c, (num_layers, batch, hidden_dim),
                                   jnp.float32)

    pred, new_h, new_c = decoder_forward(packed, x_ids, hidden, cell,
                                         tile_v=tile_v)
    jax.block_until_ready((pred, new_h, new_c))

    # Sanity check against a pure-f32 JAX reference (kernel streams weights in
    # bf16, so tolerances are set for bf16 rounding of the weights).
    pred_r, new_h_r, new_c_r = decoder_forward_ref(params, x_ids, hidden, cell)
    assert pred.shape == (batch, output_size)
    assert new_h.shape == (num_layers, batch, hidden_dim)
    assert new_c.shape == (num_layers, batch, hidden_dim)
    assert jnp.allclose(pred, pred_r, atol=1e-2, rtol=1e-2)
    assert jnp.allclose(new_h, new_h_r, atol=1e-2, rtol=1e-2)
    assert jnp.allclose(new_c, new_c_r, atol=1e-2, rtol=1e-2)

    print("KERNEL_OK")
</pallas_src>

<mosaic_0001>
module attributes {stable_mosaic.version = 11 : i64} {
  func.func @kernel(%arg0: memref<8xi32, #tpu.memory_space<smem>>, %arg1: memref<256x128xf32, #tpu.memory_space<any>>, %arg2: memref<128x512xbf16, #tpu.memory_space<vmem>>, %arg3: memref<128x512xbf16, #tpu.memory_space<vmem>>, %arg4: memref<128x512xbf16, #tpu.memory_space<vmem>>, %arg5: memref<128x512xbf16, #tpu.memory_space<vmem>>, %arg6: memref<1x512xf32, #tpu.memory_space<vmem>>, %arg7: memref<1x512xf32, #tpu.memory_space<vmem>>, %arg8: memref<2x8x128xf32, #tpu.memory_space<vmem>>, %arg9: memref<2x8x128xf32, #tpu.memory_space<vmem>>, %arg10: memref<8x128xbf16, #tpu.memory_space<vmem>>, %arg11: memref<2x8x128xf32, #tpu.memory_space<vmem>>, %arg12: memref<2x8x128xf32, #tpu.memory_space<vmem>>, %arg13: memref<8x128xf32, #tpu.memory_space<vmem>>, %arg14: memref<8x!tpu.dma_semaphore, #tpu.memory_space<semaphore_mem>>) attributes {dimension_semantics = [], scalar_prefetch = 0 : i64, scratch_operands = 2 : i64, tpu.core_type = #tpu.core_type<tc>} {
    %c0 = arith.constant 0 : index
    %0 = memref.load %arg0[%c0] : memref<8xi32, #tpu.memory_space<smem>>
    %c0_i32 = arith.constant 0 : i32
    %c0_i32_0 = arith.constant 0 : i32
    %1 = tpu.memref_slice %arg1[%0, %c0_i32_0] : memref<256x128xf32, #tpu.memory_space<any>> -> memref<1x128xf32, #tpu.memory_space<any>>
    %c0_i32_1 = arith.constant 0 : i32
    %c0_i32_2 = arith.constant 0 : i32
    %2 = tpu.memref_slice %arg13[%c0_i32_1, %c0_i32_2] : memref<8x128xf32, #tpu.memory_space<vmem>> -> memref<1x128xf32, #tpu.memory_space<vmem>>
    %3 = tpu.memref_slice %arg14[%c0_i32] : memref<8x!tpu.dma_semaphore, #tpu.memory_space<semaphore_mem>> -> memref<1x!tpu.dma_semaphore, #tpu.memory_space<semaphore_mem>>
    %4 = tpu.memref_squeeze %3 : memref<1x!tpu.dma_semaphore, #tpu.memory_space<semaphore_mem>> -> memref<!tpu.dma_semaphore, #tpu.memory_space<semaphore_mem>>
    tpu.enqueue_dma source(%1 : memref<1x128xf32, #tpu.memory_space<any>>) target(%2 : memref<1x128xf32, #tpu.memory_space<vmem>>) target_semaphore(%4 : memref<!tpu.dma_semaphore, #tpu.memory_space<semaphore_mem>>)
    %c1 = arith.constant 1 : index
    %5 = memref.load %arg0[%c1] : memref<8xi32, #tpu.memory_space<smem>>
    %c1_i32 = arith.constant 1 : i32
    %c0_i32_3 = arith.constant 0 : i32
    %6 = tpu.memref_slice %arg1[%5, %c0_i32_3] : memref<256x128xf32, #tpu.memory_space<any>> -> memref<1x128xf32, #tpu.memory_space<any>>
    %c1_i32_4 = arith.constant 1 : i32
    %c0_i32_5 = arith.constant 0 : i32
    %7 = tpu.memref_slice %arg13[%c1_i32_4, %c0_i32_5] : memref<8x128xf32, #tpu.memory_space<vmem>> -> memref<1x128xf32, #tpu.memory_space<vmem>>
    %8 = tpu.memref_slice %arg14[%c1_i32] : memref<8x!tpu.dma_semaphore, #tpu.memory_space<semaphore_mem>> -> memref<1x!tpu.dma_semaphore, #tpu.memory_space<semaphore_mem>>
    %9 = tpu.memref_squeeze %8 : memref<1x!tpu.dma_semaphore, #tpu.memory_space<semaphore_mem>> -> memref<!tpu.dma_semaphore, #tpu.memory_space<semaphore_mem>>
    tpu.enqueue_dma source(%6 : memref<1x128xf32, #tpu.memory_space<any>>) target(%7 : memref<1x128xf32, #tpu.memory_space<vmem>>) target_semaphore(%9 : memref<!tpu.dma_semaphore, #tpu.memory_space<semaphore_mem>>)
    %c2 = arith.constant 2 : index
    %10 = memref.load %arg0[%c2] : memref<8xi32, #tpu.memory_space<smem>>
    %c2_i32 = arith.constant 2 : i32
    %c0_i32_6 = arith.constant 0 : i32
    %11 = tpu.memref_slice %arg1[%10, %c0_i32_6] : memref<256x128xf32, #tpu.memory_space<any>> -> memref<1x128xf32, #tpu.memory_space<any>>
    %c2_i32_7 = arith.constant 2 : i32
    %c0_i32_8 = arith.constant 0 : i32
    %12 = tpu.memref_slice %arg13[%c2_i32_7, %c0_i32_8] : memref<8x128xf32, #tpu.memory_space<vmem>> -> memref<1x128xf32, #tpu.memory_space<vmem>>
    %13 = tpu.memref_slice %arg14[%c2_i32] : memref<8x!tpu.dma_semaphore, #tpu.memory_space<semaphore_mem>> -> memref<1x!tpu.dma_semaphore, #tpu.memory_space<semaphore_mem>>
    %14 = tpu.memref_squeeze %13 : memref<1x!tpu.dma_semaphore, #tpu.memory_space<semaphore_mem>> -> memref<!tpu.dma_semaphore, #tpu.memory_space<semaphore_mem>>
    tpu.enqueue_dma source(%11 : memref<1x128xf32, #tpu.memory_space<any>>) target(%12 : memref<1x128xf32, #tpu.memory_space<vmem>>) target_semaphore(%14 : memref<!tpu.dma_semaphore, #tpu.memory_space<semaphore_mem>>)
    %c3 = arith.constant 3 : index
    %15 = memref.load %arg0[%c3] : memref<8xi32, #tpu.memory_space<smem>>
    %c3_i32 = arith.constant 3 : i32
    %c0_i32_9 = arith.constant 0 : i32
    %16 = tpu.memref_slice %arg1[%15, %c0_i32_9] : memref<256x128xf32, #tpu.memory_space<any>> -> memref<1x128xf32, #tpu.memory_space<any>>
    %c3_i32_10 = arith.constant 3 : i32
    %c0_i32_11 = arith.constant 0 : i32
    %17 = tpu.memref_slice %arg13[%c3_i32_10, %c0_i32_11] : memref<8x128xf32, #tpu.memory_space<vmem>> -> memref<1x128xf32, #tpu.memory_space<vmem>>
    %18 = tpu.memref_slice %arg14[%c3_i32] : memref<8x!tpu.dma_semaphore, #tpu.memory_space<semaphore_mem>> -> memref<1x!tpu.dma_semaphore, #tpu.memory_space<semaphore_mem>>
    %19 = tpu.memref_squeeze %18 : memref<1x!tpu.dma_semaphore, #tpu.memory_space<semaphore_mem>> -> memref<!tpu.dma_semaphore, #tpu.memory_space<semaphore_mem>>
    tpu.enqueue_dma source(%16 : memref<1x128xf32, #tpu.memory_space<any>>) target(%17 : memref<1x128xf32, #tpu.memory_space<vmem>>) target_semaphore(%19 : memref<!tpu.dma_semaphore, #tpu.memory_space<semaphore_mem>>)
    %c4 = arith.constant 4 : index
    %20 = memref.load %arg0[%c4] : memref<8xi32, #tpu.memory_space<smem>>
    %c4_i32 = arith.constant 4 : i32
    %c0_i32_12 = arith.constant 0 : i32
    %21 = tpu.memref_slice %arg1[%20, %c0_i32_12] : memref<256x128xf32, #tpu.memory_space<any>> -> memref<1x128xf32, #tpu.memory_space<any>>
    %c4_i32_13 = arith.constant 4 : i32
    %c0_i32_14 = arith.constant 0 : i32
    %22 = tpu.memref_slice %arg13[%c4_i32_13, %c0_i32_14] : memref<8x128xf32, #tpu.memory_space<vmem>> -> memref<1x128xf32, #tpu.memory_space<vmem>>
    %23 = tpu.memref_slice %arg14[%c4_i32] : memref<8x!tpu.dma_semaphore, #tpu.memory_space<semaphore_mem>> -> memref<1x!tpu.dma_semaphore, #tpu.memory_space<semaphore_mem>>
    %24 = tpu.memref_squeeze %23 : memref<1x!tpu.dma_semaphore, #tpu.memory_space<semaphore_mem>> -> memref<!tpu.dma_semaphore, #tpu.memory_space<semaphore_mem>>
    tpu.enqueue_dma source(%21 : memref<1x128xf32, #tpu.memory_space<any>>) target(%22 : memref<1x128xf32, #tpu.memory_space<vmem>>) target_semaphore(%24 : memref<!tpu.dma_semaphore, #tpu.memory_space<semaphore_mem>>)
    %c5 = arith.constant 5 : index
    %25 = memref.load %arg0[%c5] : memref<8xi32, #tpu.memory_space<smem>>
    %c5_i32 = arith.constant 5 : i32
    %c0_i32_15 = arith.constant 0 : i32
    %26 = tpu.memref_slice %arg1[%25, %c0_i32_15] : memref<256x128xf32, #tpu.memory_space<any>> -> memref<1x128xf32, #tpu.memory_space<any>>
    %c5_i32_16 = arith.constant 5 : i32
    %c0_i32_17 = arith.constant 0 : i32
    %27 = tpu.memref_slice %arg13[%c5_i32_16, %c0_i32_17] : memref<8x128xf32, #tpu.memory_space<vmem>> -> memref<1x128xf32, #tpu.memory_space<vmem>>
    %28 = tpu.memref_slice %arg14[%c5_i32] : memref<8x!tpu.dma_semaphore, #tpu.memory_space<semaphore_mem>> -> memref<1x!tpu.dma_semaphore, #tpu.memory_space<semaphore_mem>>
    %29 = tpu.memref_squeeze %28 : memref<1x!tpu.dma_semaphore, #tpu.memory_space<semaphore_mem>> -> memref<!tpu.dma_semaphore, #tpu.memory_space<semaphore_mem>>
    tpu.enqueue_dma source(%26 : memref<1x128xf32, #tpu.memory_space<any>>) target(%27 : memref<1x128xf32, #tpu.memory_space<vmem>>) target_semaphore(%29 : memref<!tpu.dma_semaphore, #tpu.memory_space<semaphore_mem>>)
    %c6 = arith.constant 6 : index
    %30 = memref.load %arg0[%c6] : memref<8xi32, #tpu.memory_space<smem>>
    %c6_i32 = arith.constant 6 : i32
    %c0_i32_18 = arith.constant 0 : i32
    %31 = tpu.memref_slice %arg1[%30, %c0_i32_18] : memref<256x128xf32, #tpu.memory_space<any>> -> memref<1x128xf32, #tpu.memory_space<any>>
    %c6_i32_19 = arith.constant 6 : i32
    %c0_i32_20 = arith.constant 0 : i32
    %32 = tpu.memref_slice %arg13[%c6_i32_19, %c0_i32_20] : memref<8x128xf32, #tpu.memory_space<vmem>> -> memref<1x128xf32, #tpu.memory_space<vmem>>
    %33 = tpu.memref_slice %arg14[%c6_i32] : memref<8x!tpu.dma_semaphore, #tpu.memory_space<semaphore_mem>> -> memref<1x!tpu.dma_semaphore, #tpu.memory_space<semaphore_mem>>
    %34 = tpu.memref_squeeze %33 : memref<1x!tpu.dma_semaphore, #tpu.memory_space<semaphore_mem>> -> memref<!tpu.dma_semaphore, #tpu.memory_space<semaphore_mem>>
    tpu.enqueue_dma source(%31 : memref<1x128xf32, #tpu.memory_space<any>>) target(%32 : memref<1x128xf32, #tpu.memory_space<vmem>>) target_semaphore(%34 : memref<!tpu.dma_semaphore, #tpu.memory_space<semaphore_mem>>)
    %c7 = arith.constant 7 : index
    %35 = memref.load %arg0[%c7] : memref<8xi32, #tpu.memory_space<smem>>
    %c7_i32 = arith.constant 7 : i32
    %c0_i32_21 = arith.constant 0 : i32
    %36 = tpu.memref_slice %arg1[%35, %c0_i32_21] : memref<256x128xf32, #tpu.memory_space<any>> -> memref<1x128xf32, #tpu.memory_space<any>>
    %c7_i32_22 = arith.constant 7 : i32
    %c0_i32_23 = arith.constant 0 : i32
    %37 = tpu.memref_slice %arg13[%c7_i32_22, %c0_i32_23] : memref<8x128xf32, #tpu.memory_space<vmem>> -> memref<1x128xf32, #tpu.memory_space<vmem>>
    %38 = tpu.memref_slice %arg14[%c7_i32] : memref<8x!tpu.dma_semaphore, #tpu.memory_space<semaphore_mem>> -> memref<1x!tpu.dma_semaphore, #tpu.memory_space<semaphore_mem>>
    %39 = tpu.memref_squeeze %38 : memref<1x!tpu.dma_semaphore, #tpu.memory_space<semaphore_mem>> -> memref<!tpu.dma_semaphore, #tpu.memory_space<semaphore_mem>>
    tpu.enqueue_dma source(%36 : memref<1x128xf32, #tpu.memory_space<any>>) target(%37 : memref<1x128xf32, #tpu.memory_space<vmem>>) target_semaphore(%39 : memref<!tpu.dma_semaphore, #tpu.memory_space<semaphore_mem>>)
    %c0_i32_24 = arith.constant 0 : i32
    %c0_i32_25 = arith.constant 0 : i32
    %40 = tpu.memref_slice %arg1[%0, %c0_i32_25] : memref<256x128xf32, #tpu.memory_space<any>> -> memref<1x128xf32, #tpu.memory_space<any>>
    %c0_i32_26 = arith.constant 0 : i32
    %c0_i32_27 = arith.constant 0 : i32
    %41 = tpu.memref_slice %arg13[%c0_i32_26, %c0_i32_27] : memref<8x128xf32, #tpu.memory_space<vmem>> -> memref<1x128xf32, #tpu.memory_space<vmem>>
    %42 = tpu.memref_slice %arg14[%c0_i32_24] : memref<8x!tpu.dma_semaphore, #tpu.memory_space<semaphore_mem>> -> memref<1x!tpu.dma_semaphore, #tpu.memory_space<semaphore_mem>>
    %43 = tpu.memref_squeeze %42 : memref<1x!tpu.dma_semaphore, #tpu.memory_space<semaphore_mem>> -> memref<!tpu.dma_semaphore, #tpu.memory_space<semaphore_mem>>
    tpu.wait_dma2 semaphore(%43 : memref<!tpu.dma_semaphore, #tpu.memory_space<semaphore_mem>>) src(%40 : memref<1x128xf32, #tpu.memory_space<any>>) dst(%41 : memref<1x128xf32, #tpu.memory_space<vmem>>)
    %c1_i32_28 = arith.constant 1 : i32
    %c0_i32_29 = arith.constant 0 : i32
    %44 = tpu.memref_slice %arg1[%5, %c0_i32_29] : memref<256x128xf32, #tpu.memory_space<any>> -> memref<1x128xf32, #tpu.memory_space<any>>
    %c1_i32_30 = arith.constant 1 : i32
    %c0_i32_31 = arith.constant 0 : i32
    %45 = tpu.memref_slice %arg13[%c1_i32_30, %c0_i32_31] : memref<8x128xf32, #tpu.memory_space<vmem>> -> memref<1x128xf32, #tpu.memory_space<vmem>>
    %46 = tpu.memref_slice %arg14[%c1_i32_28] : memref<8x!tpu.dma_semaphore, #tpu.memory_space<semaphore_mem>> -> memref<1x!tpu.dma_semaphore, #tpu.memory_space<semaphore_mem>>
    %47 = tpu.memref_squeeze %46 : memref<1x!tpu.dma_semaphore, #tpu.memory_space<semaphore_mem>> -> memref<!tpu.dma_semaphore, #tpu.memory_space<semaphore_mem>>
    tpu.wait_dma2 semaphore(%47 : memref<!tpu.dma_semaphore, #tpu.memory_space<semaphore_mem>>) src(%44 : memref<1x128xf32, #tpu.memory_space<any>>) dst(%45 : memref<1x128xf32, #tpu.memory_space<vmem>>)
    %c2_i32_32 = arith.constant 2 : i32
    %c0_i32_33 = arith.constant 0 : i32
    %48 = tpu.memref_slice %arg1[%10, %c0_i32_33] : memref<256x128xf32, #tpu.memory_space<any>> -> memref<1x128xf32, #tpu.memory_space<any>>
    %c2_i32_34 = arith.constant 2 : i32
    %c0_i32_35 = arith.constant 0 : i32
    %49 = tpu.memref_slice %arg13[%c2_i32_34, %c0_i32_35] : memref<8x128xf32, #tpu.memory_space<vmem>> -> memref<1x128xf32, #tpu.memory_space<vmem>>
    %50 = tpu.memref_slice %arg14[%c2_i32_32] : memref<8x!tpu.dma_semaphore, #tpu.memory_space<semaphore_mem>> -> memref<1x!tpu.dma_semaphore, #tpu.memory_space<semaphore_mem>>
    %51 = tpu.memref_squeeze %50 : memref<1x!tpu.dma_semaphore, #tpu.memory_space<semaphore_mem>> -> memref<!tpu.dma_semaphore, #tpu.memory_space<semaphore_mem>>
    tpu.wait_dma2 semaphore(%51 : memref<!tpu.dma_semaphore, #tpu.memory_space<semaphore_mem>>) src(%48 : memref<1x128xf32, #tpu.memory_space<any>>) dst(%49 : memref<1x128xf32, #tpu.memory_space<vmem>>)
    %c3_i32_36 = arith.constant 3 : i32
    %c0_i32_37 = arith.constant 0 : i32
    %52 = tpu.memref_slice %arg1[%15, %c0_i32_37] : memref<256x128xf32, #tpu.memory_space<any>> -> memref<1x128xf32, #tpu.memory_space<any>>
    %c3_i32_38 = arith.constant 3 : i32
    %c0_i32_39 = arith.constant 0 : i32
    %53 = tpu.memref_slice %arg13[%c3_i32_38, %c0_i32_39] : memref<8x128xf32, #tpu.memory_space<vmem>> -> memref<1x128xf32, #tpu.memory_space<vmem>>
    %54 = tpu.memref_slice %arg14[%c3_i32_36] : memref<8x!tpu.dma_semaphore, #tpu.memory_space<semaphore_mem>> -> memref<1x!tpu.dma_semaphore, #tpu.memory_space<semaphore_mem>>
    %55 = tpu.memref_squeeze %54 : memref<1x!tpu.dma_semaphore, #tpu.memory_space<semaphore_mem>> -> memref<!tpu.dma_semaphore, #tpu.memory_space<semaphore_mem>>
    tpu.wait_dma2 semaphore(%55 : memref<!tpu.dma_semaphore, #tpu.memory_space<semaphore_mem>>) src(%52 : memref<1x128xf32, #tpu.memory_space<any>>) dst(%53 : memref<1x128xf32, #tpu.memory_space<vmem>>)
    %c4_i32_40 = arith.constant 4 : i32
    %c0_i32_41 = arith.constant 0 : i32
    %56 = tpu.memref_slice %arg1[%20, %c0_i32_41] : memref<256x128xf32, #tpu.memory_space<any>> -> memref<1x128xf32, #tpu.memory_space<any>>
    %c4_i32_42 = arith.constant 4 : i32
    %c0_i32_43 = arith.constant 0 : i32
    %57 = tpu.memref_slice %arg13[%c4_i32_42, %c0_i32_43] : memref<8x128xf32, #tpu.memory_space<vmem>> -> memref<1x128xf32, #tpu.memory_space<vmem>>
    %58 = tpu.memref_slice %arg14[%c4_i32_40] : memref<8x!tpu.dma_semaphore, #tpu.memory_space<semaphore_mem>> -> memref<1x!tpu.dma_semaphore, #tpu.memory_space<semaphore_mem>>
    %59 = tpu.memref_squeeze %58 : memref<1x!tpu.dma_semaphore, #tpu.memory_space<semaphore_mem>> -> memref<!tpu.dma_semaphore, #tpu.memory_space<semaphore_mem>>
    tpu.wait_dma2 semaphore(%59 : memref<!tpu.dma_semaphore, #tpu.memory_space<semaphore_mem>>) src(%56 : memref<1x128xf32, #tpu.memory_space<any>>) dst(%57 : memref<1x128xf32, #tpu.memory_space<vmem>>)
    %c5_i32_44 = arith.constant 5 : i32
    %c0_i32_45 = arith.constant 0 : i32
    %60 = tpu.memref_slice %arg1[%25, %c0_i32_45] : memref<256x128xf32, #tpu.memory_space<any>> -> memref<1x128xf32, #tpu.memory_space<any>>
    %c5_i32_46 = arith.constant 5 : i32
    %c0_i32_47 = arith.constant 0 : i32
    %61 = tpu.memref_slice %arg13[%c5_i32_46, %c0_i32_47] : memref<8x128xf32, #tpu.memory_space<vmem>> -> memref<1x128xf32, #tpu.memory_space<vmem>>
    %62 = tpu.memref_slice %arg14[%c5_i32_44] : memref<8x!tpu.dma_semaphore, #tpu.memory_space<semaphore_mem>> -> memref<1x!tpu.dma_semaphore, #tpu.memory_space<semaphore_mem>>
    %63 = tpu.memref_squeeze %62 : memref<1x!tpu.dma_semaphore, #tpu.memory_space<semaphore_mem>> -> memref<!tpu.dma_semaphore, #tpu.memory_space<semaphore_mem>>
    tpu.wait_dma2 semaphore(%63 : memref<!tpu.dma_semaphore, #tpu.memory_space<semaphore_mem>>) src(%60 : memref<1x128xf32, #tpu.memory_space<any>>) dst(%61 : memref<1x128xf32, #tpu.memory_space<vmem>>)
    %c6_i32_48 = arith.constant 6 : i32
    %c0_i32_49 = arith.constant 0 : i32
    %64 = tpu.memref_slice %arg1[%30, %c0_i32_49] : memref<256x128xf32, #tpu.memory_space<any>> -> memref<1x128xf32, #tpu.memory_space<any>>
    %c6_i32_50 = arith.constant 6 : i32
    %c0_i32_51 = arith.constant 0 : i32
    %65 = tpu.memref_slice %arg13[%c6_i32_50, %c0_i32_51] : memref<8x128xf32, #tpu.memory_space<vmem>> -> memref<1x128xf32, #tpu.memory_space<vmem>>
    %66 = tpu.memref_slice %arg14[%c6_i32_48] : memref<8x!tpu.dma_semaphore, #tpu.memory_space<semaphore_mem>> -> memref<1x!tpu.dma_semaphore, #tpu.memory_space<semaphore_mem>>
    %67 = tpu.memref_squeeze %66 : memref<1x!tpu.dma_semaphore, #tpu.memory_space<semaphore_mem>> -> memref<!tpu.dma_semaphore, #tpu.memory_space<semaphore_mem>>
    tpu.wait_dma2 semaphore(%67 : memref<!tpu.dma_semaphore, #tpu.memory_space<semaphore_mem>>) src(%64 : memref<1x128xf32, #tpu.memory_space<any>>) dst(%65 : memref<1x128xf32, #tpu.memory_space<vmem>>)
    %c7_i32_52 = arith.constant 7 : i32
    %c0_i32_53 = arith.constant 0 : i32
    %68 = tpu.memref_slice %arg1[%35, %c0_i32_53] : memref<256x128xf32, #tpu.memory_space<any>> -> memref<1x128xf32, #tpu.memory_space<any>>
    %c7_i32_54 = arith.constant 7 : i32
    %c0_i32_55 = arith.constant 0 : i32
    %69 = tpu.memref_slice %arg13[%c7_i32_54, %c0_i32_55] : memref<8x128xf32, #tpu.memory_space<vmem>> -> memref<1x128xf32, #tpu.memory_space<vmem>>
    %70 = tpu.memref_slice %arg14[%c7_i32_52] : memref<8x!tpu.dma_semaphore, #tpu.memory_space<semaphore_mem>> -> memref<1x!tpu.dma_semaphore, #tpu.memory_space<semaphore_mem>>
    %71 = tpu.memref_squeeze %70 : memref<1x!tpu.dma_semaphore, #tpu.memory_space<semaphore_mem>> -> memref<!tpu.dma_semaphore, #tpu.memory_space<semaphore_mem>>
    tpu.wait_dma2 semaphore(%71 : memref<!tpu.dma_semaphore, #tpu.memory_space<semaphore_mem>>) src(%68 : memref<1x128xf32, #tpu.memory_space<any>>) dst(%69 : memref<1x128xf32, #tpu.memory_space<vmem>>)
    %c0_56 = arith.constant 0 : index
    %c0_57 = arith.constant 0 : index
    %72 = vector.load %arg13[%c0_56, %c0_57] : memref<8x128xf32, #tpu.memory_space<vmem>>, vector<8x128xf32>
    %73 = arith.truncf %72 : vector<8x128xf32> to vector<8x128xbf16>
    %c0_58 = arith.constant 0 : index
    %c0_59 = arith.constant 0 : index
    %c0_60 = arith.constant 0 : index
    %74 = vector.load %arg8[%c0_58, %c0_59, %c0_60] : memref<2x8x128xf32, #tpu.memory_space<vmem>>, vector<1x8x128xf32>
    %75 = vector.shape_cast %74 : vector<1x8x128xf32> to vector<8x128xf32>
    %c0_61 = arith.constant 0 : index
    %c0_62 = arith.constant 0 : index
    %c0_63 = arith.constant 0 : index
    %76 = vector.load %arg9[%c0_61, %c0_62, %c0_63] : memref<2x8x128xf32, #tpu.memory_space<vmem>>, vector<1x8x128xf32>
    %77 = vector.shape_cast %76 : vector<1x8x128xf32> to vector<8x128xf32>
    %c0_64 = arith.constant 0 : index
    %c0_65 = arith.constant 0 : index
    %78 = vector.load %arg2[%c0_64, %c0_65] : memref<128x512xbf16, #tpu.memory_space<vmem>>, vector<128x512xbf16>
    %cst = arith.constant dense<0.000000e+00> : vector<8x512xf32>
    %79 = tpu.matmul %73, %78, %cst {dimension_numbers = #tpu.dot_dimension_numbers<[1], [0], [0], [1], [0, 0, 1, 1], [], []>} : vector<8x128xbf16>, vector<128x512xbf16>, vector<8x512xf32> -> vector<8x512xf32>
    %80 = arith.truncf %75 : vector<8x128xf32> to vector<8x128xbf16>
    %c0_66 = arith.constant 0 : index
    %c0_67 = arith.constant 0 : index
    %81 = vector.load %arg4[%c0_66, %c0_67] : memref<128x512xbf16, #tpu.memory_space<vmem>>, vector<128x512xbf16>
    %cst_68 = arith.constant dense<0.000000e+00> : vector<8x512xf32>
    %82 = tpu.matmul %80, %81, %cst_68 {dimension_numbers = #tpu.dot_dimension_numbers<[1], [0], [0], [1], [0, 0, 1, 1], [], []>} : vector<8x128xbf16>, vector<128x512xbf16>, vector<8x512xf32> -> vector<8x512xf32>
    %83 = arith.addf %79, %82 : vector<8x512xf32>
    %c0_69 = arith.constant 0 : index
    %c0_70 = arith.constant 0 : index
    %84 = vector.load %arg6[%c0_69, %c0_70] : memref<1x512xf32, #tpu.memory_space<vmem>>, vector<1x512xf32>
    %85 = vector.broadcast %84 : vector<1x512xf32> to vector<8x512xf32>
    %86 = arith.addf %83, %85 : vector<8x512xf32>
    %87 = vector.extract_strided_slice %86 {offsets = [0, 0], sizes = [8, 128], strides = [1, 1]} : vector<8x512xf32> to vector<8x128xf32>
    %88 = arith.negf %87 : vector<8x128xf32>
    %89 = math.exp %88 : vector<8x128xf32>
    %cst_71 = arith.constant 1.000000e+00 : f32
    %90 = vector.broadcast %cst_71 : f32 to vector<8x128xf32>
    %91 = arith.addf %90, %89 : vector<8x128xf32>
    %92 = arith.divf %90, %91 : vector<8x128xf32>
    %93 = vector.extract_strided_slice %86 {offsets = [0, 128], sizes = [8, 128], strides = [1, 1]} : vector<8x512xf32> to vector<8x128xf32>
    %94 = arith.negf %93 : vector<8x128xf32>
    %95 = math.exp %94 : vector<8x128xf32>
    %cst_72 = arith.constant 1.000000e+00 : f32
    %96 = vector.broadcast %cst_72 : f32 to vector<8x128xf32>
    %97 = arith.addf %96, %95 : vector<8x128xf32>
    %98 = arith.divf %96, %97 : vector<8x128xf32>
    %99 = vector.extract_strided_slice %86 {offsets = [0, 256], sizes = [8, 128], strides = [1, 1]} : vector<8x512xf32> to vector<8x128xf32>
    %100 = math.tanh %99 : vector<8x128xf32>
    %101 = vector.extract_strided_slice %86 {offsets = [0, 384], sizes = [8, 128], strides = [1, 1]} : vector<8x512xf32> to vector<8x128xf32>
    %102 = arith.negf %101 : vector<8x128xf32>
    %103 = math.exp %102 : vector<8x128xf32>
    %cst_73 = arith.constant 1.000000e+00 : f32
    %104 = vector.broadcast %cst_73 : f32 to vector<8x128xf32>
    %105 = arith.addf %104, %103 : vector<8x128xf32>
    %106 = arith.divf %104, %105 : vector<8x128xf32>
    %107 = arith.mulf %98, %77 : vector<8x128xf32>
    %108 = arith.mulf %92, %100 : vector<8x128xf32>
    %109 = arith.addf %107, %108 : vector<8x128xf32>
    %110 = math.tanh %109 : vector<8x128xf32>
    %111 = arith.mulf %106, %110 : vector<8x128xf32>
    %c0_74 = arith.constant 0 : index
    %c0_75 = arith.constant 0 : index
    %c0_76 = arith.constant 0 : index
    %112 = vector.load %arg11[%c0_74, %c0_75, %c0_76] : memref<2x8x128xf32, #tpu.memory_space<vmem>>, vector<1x8x128xf32>
    %113 = vector.shape_cast %112 : vector<1x8x128xf32> to vector<8x128xf32>
    %114 = vector.shape_cast %111 : vector<8x128xf32> to vector<1x8x128xf32>
    tpu.vector_store %arg11[%c0_74, %c0_75, %c0_76], %114 {strides = array<i32>} : memref<2x8x128xf32, #tpu.memory_space<vmem>>, vector<1x8x128xf32>,
    %c0_77 = arith.constant 0 : index
    %c0_78 = arith.constant 0 : index
    %c0_79 = arith.constant 0 : index
    %115 = vector.load %arg12[%c0_77, %c0_78, %c0_79] : memref<2x8x128xf32, #tpu.memory_space<vmem>>, vector<1x8x128xf32>
    %116 = vector.shape_cast %115 : vector<1x8x128xf32> to vector<8x128xf32>
    %117 = vector.shape_cast %109 : vector<8x128xf32> to vector<1x8x128xf32>
    tpu.vector_store %arg12[%c0_77, %c0_78, %c0_79], %117 {strides = array<i32>} : memref<2x8x128xf32, #tpu.memory_space<vmem>>, vector<1x8x128xf32>,
    %118 = arith.truncf %111 : vector<8x128xf32> to vector<8x128xbf16>
    %c1_80 = arith.constant 1 : index
    %c0_81 = arith.constant 0 : index
    %c0_82 = arith.constant 0 : index
    %119 = vector.load %arg8[%c1_80, %c0_81, %c0_82] : memref<2x8x128xf32, #tpu.memory_space<vmem>>, vector<1x8x128xf32>
    %120 = vector.shape_cast %119 : vector<1x8x128xf32> to vector<8x128xf32>
    %c1_83 = arith.constant 1 : index
    %c0_84 = arith.constant 0 : index
    %c0_85 = arith.constant 0 : index
    %121 = vector.load %arg9[%c1_83, %c0_84, %c0_85] : memref<2x8x128xf32, #tpu.memory_space<vmem>>, vector<1x8x128xf32>
    %122 = vector.shape_cast %121 : vector<1x8x128xf32> to vector<8x128xf32>
    %c0_86 = arith.constant 0 : index
    %c0_87 = arith.constant 0 : index
    %123 = vector.load %arg3[%c0_86, %c0_87] : memref<128x512xbf16, #tpu.memory_space<vmem>>, vector<128x512xbf16>
    %cst_88 = arith.constant dense<0.000000e+00> : vector<8x512xf32>
    %124 = tpu.matmul %118, %123, %cst_88 {dimension_numbers = #tpu.dot_dimension_numbers<[1], [0], [0], [1], [0, 0, 1, 1], [], []>} : vector<8x128xbf16>, vector<128x512xbf16>, vector<8x512xf32> -> vector<8x512xf32>
    %125 = arith.truncf %120 : vector<8x128xf32> to vector<8x128xbf16>
    %c0_89 = arith.constant 0 : index
    %c0_90 = arith.constant 0 : index
    %126 = vector.load %arg5[%c0_89, %c0_90] : memref<128x512xbf16, #tpu.memory_space<vmem>>, vector<128x512xbf16>
    %cst_91 = arith.constant dense<0.000000e+00> : vector<8x512xf32>
    %127 = tpu.matmul %125, %126, %cst_91 {dimension_numbers = #tpu.dot_dimension_numbers<[1], [0], [0], [1], [0, 0, 1, 1], [], []>} : vector<8x128xbf16>, vector<128x512xbf16>, vector<8x512xf32> -> vector<8x512xf32>
    %128 = arith.addf %124, %127 : vector<8x512xf32>
    %c0_92 = arith.constant 0 : index
    %c0_93 = arith.constant 0 : index
    %129 = vector.load %arg7[%c0_92, %c0_93] : memref<1x512xf32, #tpu.memory_space<vmem>>, vector<1x512xf32>
    %130 = vector.broadcast %129 : vector<1x512xf32> to vector<8x512xf32>
    %131 = arith.addf %128, %130 : vector<8x512xf32>
    %132 = vector.extract_strided_slice %131 {offsets = [0, 0], sizes = [8, 128], strides = [1, 1]} : vector<8x512xf32> to vector<8x128xf32>
    %133 = arith.negf %132 : vector<8x128xf32>
    %134 = math.exp %133 : vector<8x128xf32>
    %cst_94 = arith.constant 1.000000e+00 : f32
    %135 = vector.broadcast %cst_94 : f32 to vector<8x128xf32>
    %136 = arith.addf %135, %134 : vector<8x128xf32>
    %137 = arith.divf %135, %136 : vector<8x128xf32>
    %138 = vector.extract_strided_slice %131 {offsets = [0, 128], sizes = [8, 128], strides = [1, 1]} : vector<8x512xf32> to vector<8x128xf32>
    %139 = arith.negf %138 : vector<8x128xf32>
    %140 = math.exp %139 : vector<8x128xf32>
    %cst_95 = arith.constant 1.000000e+00 : f32
    %141 = vector.broadcast %cst_95 : f32 to vector<8x128xf32>
    %142 = arith.addf %141, %140 : vector<8x128xf32>
    %143 = arith.divf %141, %142 : vector<8x128xf32>
    %144 = vector.extract_strided_slice %131 {offsets = [0, 256], sizes = [8, 128], strides = [1, 1]} : vector<8x512xf32> to vector<8x128xf32>
    %145 = math.tanh %144 : vector<8x128xf32>
    %146 = vector.extract_strided_slice %131 {offsets = [0, 384], sizes = [8, 128], strides = [1, 1]} : vector<8x512xf32> to vector<8x128xf32>
    %147 = arith.negf %146 : vector<8x128xf32>
    %148 = math.exp %147 : vector<8x128xf32>
    %cst_96 = arith.constant 1.000000e+00 : f32
    %149 = vector.broadcast %cst_96 : f32 to vector<8x128xf32>
    %150 = arith.addf %149, %148 : vector<8x128xf32>
    %151 = arith.divf %149, %150 : vector<8x128xf32>
    %152 = arith.mulf %143, %122 : vector<8x128xf32>
    %153 = arith.mulf %137, %145 : vector<8x128xf32>
    %154 = arith.addf %152, %153 : vector<8x128xf32>
    %155 = math.tanh %154 : vector<8x128xf32>
    %156 = arith.mulf %151, %155 : vector<8x128xf32>
    %c1_97 = arith.constant 1 : index
    %c0_98 = arith.constant 0 : index
    %c0_99 = arith.constant 0 : index
    %157 = vector.load %arg11[%c1_97, %c0_98, %c0_99] : memref<2x8x128xf32, #tpu.memory_space<vmem>>, vector<1x8x128xf32>
    %158 = vector.shape_cast %157 : vector<1x8x128xf32> to vector<8x128xf32>
    %159 = vector.shape_cast %156 : vector<8x128xf32> to vector<1x8x128xf32>
    tpu.vector_store %arg11[%c1_97, %c0_98, %c0_99], %159 {strides = array<i32>} : memref<2x8x128xf32, #tpu.memory_space<vmem>>, vector<1x8x128xf32>,
    %c1_100 = arith.constant 1 : index
    %c0_101 = arith.constant 0 : index
    %c0_102 = arith.constant 0 : index
    %160 = vector.load %arg12[%c1_100, %c0_101, %c0_102] : memref<2x8x128xf32, #tpu.memory_space<vmem>>, vector<1x8x128xf32>
    %161 = vector.shape_cast %160 : vector<1x8x128xf32> to vector<8x128xf32>
    %162 = vector.shape_cast %154 : vector<8x128xf32> to vector<1x8x128xf32>
    tpu.vector_store %arg12[%c1_100, %c0_101, %c0_102], %162 {strides = array<i32>} : memref<2x8x128xf32, #tpu.memory_space<vmem>>, vector<1x8x128xf32>,
    %163 = arith.truncf %156 : vector<8x128xf32> to vector<8x128xbf16>
    %c0_103 = arith.constant 0 : index
    %c0_104 = arith.constant 0 : index
    %164 = vector.load %arg10[%c0_103, %c0_104] : memref<8x128xbf16, #tpu.memory_space<vmem>>, vector<8x128xbf16>
    tpu.vector_store %arg10[%c0_103, %c0_104], %163 {strides = array<i32>} : memref<8x128xbf16, #tpu.memory_space<vmem>>, vector<8x128xbf16>,
    return
  }
}

</mosaic_0001>

<llo_original>
// kernel: tpu_custom_call.1
$region0: #{tpu_custom_call.1}
  #allocation0 [shape = 'u32[]', space=smem, size = 0x4, offset = 0x4, fixed_abs, tag = 'smem constant byte address 0x4 - core index']
  #allocation1 [shape = 'u32[144,128]{1,0:T(1,128)}', space=vmem, size = 0x12000, scoped, tag = 'internal scratch']
  #allocation2 [shape = 'f32[8,128]{1,0:T(8,128)}', space=vmem, size = 0x1000, scoped, tag = 'scratch operand']
  #allocation3 [shape = 's32[8]{0}', space=sflag, size = 0x20, scoped, tag = 'scratch operand']
  #allocation21 [shape = 's32[]', space=sflag, size = 0x4, offset = 0, fixed_abs, tag = 'sflag constant byte address 0x0 - dummy sync flag']
  #allocation22 [shape = 's32[]', space=sflag, size = 0x4, offset = 0, fixed_abs, tag = 'sflag constant byte address 0x0 - dummy sync flag']
  #allocation23 [shape = 'u32[]', space=smem, size = 0x4, offset = 0x44, fixed_abs, tag = 'smem constant byte address 0x44 - assertion arg 0']
  #allocation24 [shape = 'u32[]', space=smem, size = 0x4, offset = 0x48, fixed_abs, tag = 'smem constant byte address 0x48 - assertion arg 1']
  #allocation25 [shape = 's32[]', space=sflag, size = 0x4, offset = 0, fixed_abs, tag = 'sflag constant byte address 0x0 - dummy sync flag']
  #allocation26 [shape = 's32[]', space=sflag, size = 0x4, offset = 0, fixed_abs, tag = 'sflag constant byte address 0x0 - dummy sync flag']
  #allocation27 [shape = 's32[]', space=sflag, size = 0x4, offset = 0, fixed_abs, tag = 'sflag constant byte address 0x0 - dummy sync flag']
  #allocation28 [shape = 's32[]', space=sflag, size = 0x4, offset = 0, fixed_abs, tag = 'sflag constant byte address 0x0 - dummy sync flag']
  #allocation29 [shape = 's32[]', space=sflag, size = 0x4, offset = 0, fixed_abs, tag = 'sflag constant byte address 0x0 - dummy sync flag']
  #allocation30 [shape = 's32[]', space=sflag, size = 0x4, offset = 0, fixed_abs, tag = 'sflag constant byte address 0x0 - dummy sync flag']
  #allocation31 [shape = 's32[]', space=sflag, size = 0x4, offset = 0, fixed_abs, tag = 'sflag constant byte address 0x0 - dummy sync flag']
  #allocation32 [shape = 's32[]', space=sflag, size = 0x4, offset = 0, fixed_abs, tag = 'sflag constant byte address 0x0 - dummy sync flag']
  #allocation33 [shape = 's32[]', space=sflag, size = 0x4, offset = 0, fixed_abs, tag = 'sflag constant byte address 0x0 - dummy sync flag']
  #allocation34 [shape = 's32[]', space=sflag, size = 0x4, offset = 0, fixed_abs, tag = 'sflag constant byte address 0x0 - dummy sync flag']
  #allocation35 [shape = 's32[]', space=sflag, size = 0x4, offset = 0, fixed_abs, tag = 'sflag constant byte address 0x0 - dummy sync flag']
  #allocation36 [shape = 's32[]', space=sflag, size = 0x4, offset = 0, fixed_abs, tag = 'sflag constant byte address 0x0 - dummy sync flag']
  #allocation37 [shape = 's32[]', space=sflag, size = 0x4, offset = 0, fixed_abs, tag = 'sflag constant byte address 0x0 - dummy sync flag']
  #allocation38 [shape = 's32[]', space=sflag, size = 0x4, offset = 0, fixed_abs, tag = 'sflag constant byte address 0x0 - dummy sync flag']
  %s0 = inlined_call_operand.hbm [shape: s32[8], index: 0, kind: input, shape index: {}]
  %s1 = inlined_call_operand.hbm [shape: f32[256,128], index: 1, kind: input, shape index: {}]
  %s2 = inlined_call_operand.hbm [shape: bf16[128,512], index: 2, kind: input, shape index: {}]
  %s3 = inlined_call_operand.hbm [shape: bf16[128,512], index: 3, kind: input, shape index: {}]
  %s4 = inlined_call_operand.hbm [shape: bf16[128,512], index: 4, kind: input, shape index: {}]
  %s5 = inlined_call_operand.hbm [shape: bf16[128,512], index: 5, kind: input, shape index: {}]
  %s6 = inlined_call_operand.hbm [shape: f32[1,512], index: 6, kind: input, shape index: {}]
  %s7 = inlined_call_operand.hbm [shape: f32[1,512], index: 7, kind: input, shape index: {}]
  %s8 = inlined_call_operand.vmem [shape: f32[2,8,128], index: 8, kind: input, shape index: {}]
  %s9 = inlined_call_operand.vmem [shape: f32[2,8,128], index: 9, kind: input, shape index: {}]
  %s10 = inlined_call_operand.hbm [shape: bf16[8,128], index: 10, kind: output, shape index: {0}]
  %s11 = inlined_call_operand.hbm [shape: f32[2,8,128], index: 11, kind: output, shape index: {1}]
  %s12 = inlined_call_operand.hbm [shape: f32[2,8,128], index: 12, kind: output, shape index: {2}]
  %13 = xla_tuple %s10, %s11, %s12
  %s14 = sld [smem:[#allocation0]]
  $region122: #{tpu_custom_call.1} parent=0
    _
  %s16 = ssub.s32 1, %s14
  %s17 = scalar_select 0, %s16, %s14
  $region1: #{tpu_custom_call.1} parent=0
    #allocation4 [shape = 'u8[512]{0}', space=smem, size = 0x200, scoped, tag = 'input window, operand 0, single buffered']
    #allocation5 [shape = 's32[1]{0}', space=sflag, size = 0x4, scoped, tag = 'scoped memory for tpu_custom_call.1']
    #allocation6 [shape = 's32[1]{0}', space=sflag, size = 0x4, scoped, tag = 'scoped memory for tpu_custom_call.1']
    #allocation7 [shape = 's32[1]{0}', space=sflag, size = 0x4, scoped, tag = 'scoped memory for tpu_custom_call.1']
    #allocation8 [shape = 'u8[131072]{0}', space=vmem, size = 0x20000, scoped, tag = 'input window, operand 2, single buffered']
    #allocation9 [shape = 'u8[131072]{0}', space=vmem, size = 0x20000, scoped, tag = 'input window, operand 3, single buffered']
    #allocation10 [shape = 's32[1]{0}', space=sflag, size = 0x4, scoped, tag = 'scoped memory for tpu_custom_call.1']
    #allocation11 [shape = 'u8[131072]{0}', space=vmem, size = 0x20000, scoped, tag = 'input window, operand 4, single buffered']
    #allocation12 [shape = 'u8[131072]{0}', space=vmem, size = 0x20000, scoped, tag = 'input window, operand 5, single buffered']
    #allocation13 [shape = 's32[1]{0}', space=sflag, size = 0x4, scoped, tag = 'scoped memory for tpu_custom_call.1']
    #allocation14 [shape = 'u8[2048]{0}', space=vmem, size = 0x800, scoped, tag = 'input window, operand 6, single buffered']
    #allocation15 [shape = 'u8[2048]{0}', space=vmem, size = 0x800, scoped, tag = 'input window, operand 7, single buffered']
    #allocation16 [shape = 's32[1]{0}', space=sflag, size = 0x4, scoped, tag = 'scoped memory for tpu_custom_call.1']
    #allocation17 [shape = 'u8[2048]{0}', space=vmem, size = 0x800, scoped, tag = 'output window, operand 0, single buffered']
    #allocation18 [shape = 'u8[8192]{0}', space=vmem, size = 0x2000, scoped, tag = 'output window, operand 1, single buffered']
    #allocation19 [shape = 's32[1]{0}', space=sflag, size = 0x4, scoped, tag = 'scoped memory for tpu_custom_call.1']
    #allocation20 [shape = 'u8[8192]{0}', space=vmem, size = 0x2000, scoped, tag = 'output window, operand 2, single buffered']
    %18 = vsyncpa [#allocation7], 0
    %19 = vsyncpa [#allocation5], 0
    %20 = vsyncpa [#allocation10], 0
    %21 = vsyncpa [#allocation13], 0
    %22 = vsyncpa [#allocation16], 0
    %23 = vsyncpa [#allocation6], 0
    %24 = vsyncpa [#allocation19], 0
    // Predicated region
    $region2: #{tpu_custom_call.1} parent=1 // pred_check
      _
    $region3: #{tpu_custom_call.1} parent=1 // pred_check_branch
      %26 = sbr.rel (0) target = $region5
    $region4: #{tpu_custom_call.1} parent=1 // pred_region
      %s28 = ssub.s32 16, 16
      %29 = vsyncadd [#allocation7], %s28
      %32 = dma.hbm_to_smem %s0, 16, [#allocation4], [#allocation7]
    $region5: #{tpu_custom_call.1} parent=1 // pred_fallthru
      _
    // Predicated region
    $region6: #{tpu_custom_call.1} parent=1 // pred_check
      _
    $region7: #{tpu_custom_call.1} parent=1 // pred_check_branch
      %34 = sbr.rel (0) target = $region9
    $region8: #{tpu_custom_call.1} parent=1 // pred_region
      %s36 = ssub.s32 4096, 4096
      %37 = vsyncadd [#allocation5], %s36
      %s38 = sshll.u32 [#allocation8], 4
      %s39 = int_to_ptr.vmem [resolvable:$true] %s38
      %44 = dma.hbm_to_vmem [thread:$0]  %s2, 4096, %s39, [#allocation5], 256, 256, 16
    $region9: #{tpu_custom_call.1} parent=1 // pred_fallthru
      _
    // Predicated region
    $region10: #{tpu_custom_call.1} parent=1 // pred_check
      _
    $region11: #{tpu_custom_call.1} parent=1 // pred_check_branch
      %46 = sbr.rel (0) target = $region13
    $region12: #{tpu_custom_call.1} parent=1 // pred_region
      %s48 = ssub.s32 4096, 4096
      %49 = vsyncadd [#allocation10], %s48
      %s50 = sshll.u32 [#allocation9], 4
      %s51 = int_to_ptr.vmem [resolvable:$true] %s50
      %56 = dma.hbm_to_vmem [thread:$0]  %s3, 4096, %s51, [#allocation10], 256, 256, 16
    $region13: #{tpu_custom_call.1} parent=1 // pred_fallthru
      _
    // Predicated region
    $region14: #{tpu_custom_call.1} parent=1 // pred_check
      _
    $region15: #{tpu_custom_call.1} parent=1 // pred_check_branch
      %58 = sbr.rel (0) target = $region17
    $region16: #{tpu_custom_call.1} parent=1 // pred_region
      %s60 = ssub.s32 4096, 4096
      %61 = vsyncadd [#allocation10], %s60
      %s62 = sshll.u32 [#allocation11], 4
      %s63 = int_to_ptr.vmem [resolvable:$true] %s62
      %68 = dma.hbm_to_vmem [thread:$0]  %s4, 4096, %s63, [#allocation10], 256, 256, 16
    $region17: #{tpu_custom_call.1} parent=1 // pred_fallthru
      _
    // Predicated region
    $region18: #{tpu_custom_call.1} parent=1 // pred_check
      _
    $region19: #{tpu_custom_call.1} parent=1 // pred_check_branch
      %70 = sbr.rel (0) target = $region21
    $region20: #{tpu_custom_call.1} parent=1 // pred_region
      %s72 = ssub.s32 4096, 4096
      %73 = vsyncadd [#allocation13], %s72
      %s74 = sshll.u32 [#allocation12], 4
      %s75 = int_to_ptr.vmem [resolvable:$true] %s74
      %80 = dma.hbm_to_vmem [thread:$0]  %s5, 4096, %s75, [#allocation13], 256, 256, 16
    $region21: #{tpu_custom_call.1} parent=1 // pred_fallthru
      _
    // Predicated region
    $region22: #{tpu_custom_call.1} parent=1 // pred_check
      _
    $region23: #{tpu_custom_call.1} parent=1 // pred_check_branch
      %82 = sbr.rel (0) target = $region25
    $region24: #{tpu_custom_call.1} parent=1 // pred_region
      %s84 = ssub.s32 64, 64
      %85 = vsyncadd [#allocation13], %s84
      %s87 = sshll.u32 [#allocation14], 4
      %s88 = int_to_ptr.vmem [resolvable:$true] %s87
      %90 = dma.hbm_to_vmem [thread:$0]  %s6, 64, %s88, [#allocation13]
    $region25: #{tpu_custom_call.1} parent=1 // pred_fallthru
      _
    // Predicated region
    $region26: #{tpu_custom_call.1} parent=1 // pred_check
      _
    $region27: #{tpu_custom_call.1} parent=1 // pred_check_branch
      %92 = sbr.rel (0) target = $region29
    $region28: #{tpu_custom_call.1} parent=1 // pred_region
      %s94 = ssub.s32 64, 64
      %95 = vsyncadd [#allocation16], %s94
      %s97 = sshll.u32 [#allocation15], 4
      %s98 = int_to_ptr.vmem [resolvable:$true] %s97
      %100 = dma.hbm_to_vmem [thread:$0]  %s7, 64, %s98, [#allocation16]
    $region29: #{tpu_custom_call.1} parent=1 // pred_fallthru
      _
    // Predicated region
    $region30: #{tpu_custom_call.1} parent=1 // pred_check
      _
    $region31: #{tpu_custom_call.1} parent=1 // pred_check_branch
      %102 = sbr.rel (0) target = $region33
    $region32: #{tpu_custom_call.1} parent=1 // pred_region
      _
    $region33: #{tpu_custom_call.1} parent=1 // pred_fallthru
      _
    // Predicated region
    $region34: #{tpu_custom_call.1} parent=1 // pred_check
      _
    $region35: #{tpu_custom_call.1} parent=1 // pred_check_branch
      %104 = sbr.rel (0) target = $region37
    $region36: #{tpu_custom_call.1} parent=1 // pred_region
      _
    $region37: #{tpu_custom_call.1} parent=1 // pred_fallthru
      _
    // Predicated region
    $region38: #{tpu_custom_call.1} parent=1 // pred_check
      _
    $region39: #{tpu_custom_call.1} parent=1 // pred_check_branch
      %106 = sbr.rel (0) target = $region41
    $region40: #{tpu_custom_call.1} parent=1 // pred_region
      %107 = dma.done [#allocation7], 16
    $region41: #{tpu_custom_call.1} parent=1 // pred_fallthru
      _
    // Predicated region
    $region42: #{tpu_custom_call.1} parent=1 // pred_check
      _
    $region43: #{tpu_custom_call.1} parent=1 // pred_check_branch
      %109 = sbr.rel (0) target = $region45
    $region44: #{tpu_custom_call.1} parent=1 // pred_region
      %110 = dma.done [#allocation5], 4096
    $region45: #{tpu_custom_call.1} parent=1 // pred_fallthru
      _
    // Predicated region
    $region46: #{tpu_custom_call.1} parent=1 // pred_check
      _
    $region47: #{tpu_custom_call.1} parent=1 // pred_check_branch
      %112 = sbr.rel (0) target = $region49
    $region48: #{tpu_custom_call.1} parent=1 // pred_region
      %113 = dma.done [#allocation10], 4096
    $region49: #{tpu_custom_call.1} parent=1 // pred_fallthru
      _
    // Predicated region
    $region50: #{tpu_custom_call.1} parent=1 // pred_check
      _
    $region51: #{tpu_custom_call.1} parent=1 // pred_check_branch
      %115 = sbr.rel (0) target = $region53
    $region52: #{tpu_custom_call.1} parent=1 // pred_region
      %116 = dma.done [#allocation10], 4096
    $region53: #{tpu_custom_call.1} parent=1 // pred_fallthru
      _
    // Predicated region
    $region54: #{tpu_custom_call.1} parent=1 // pred_check
      _
    $region55: #{tpu_custom_call.1} parent=1 // pred_check_branch
      %118 = sbr.rel (0) target = $region57
    $region56: #{tpu_custom_call.1} parent=1 // pred_region
      %119 = dma.done [#allocation13], 4096
    $region57: #{tpu_custom_call.1} parent=1 // pred_fallthru
      _
    // Predicated region
    $region58: #{tpu_custom_call.1} parent=1 // pred_check
      _
    $region59: #{tpu_custom_call.1} parent=1 // pred_check_branch
      %121 = sbr.rel (0) target = $region61
    $region60: #{tpu_custom_call.1} parent=1 // pred_region
      %122 = dma.done [#allocation13], 64
    $region61: #{tpu_custom_call.1} parent=1 // pred_fallthru
      _
    // Predicated region
    $region62: #{tpu_custom_call.1} parent=1 // pred_check
      _
    $region63: #{tpu_custom_call.1} parent=1 // pred_check_branch
      %124 = sbr.rel (0) target = $region65
    $region64: #{tpu_custom_call.1} parent=1 // pred_region
      %125 = dma.done [#allocation16], 64
    $region65: #{tpu_custom_call.1} parent=1 // pred_fallthru
      _
    %126 = sfence
    %s128 = sld [smem:[#allocation4]]
    %s129 = smul.addr %s128, 16
    %s130 = scalar_lea.hbm %s1, %s129
    // Predicated region
    $region66: #{tpu_custom_call.1} parent=1 // pred_check
      _
    $region67: #{tpu_custom_call.1} parent=1 // pred_check_branch
      %132 = sbr.rel target = $region69
    $region68: #{tpu_custom_call.1} parent=1 // pred_region
      %133 = sst [smem:[#allocation23]] [#allocation22]
      %134 = sst [smem:[#allocation24]] [#allocation21]
    $region69: #{tpu_custom_call.1} parent=1 // pred_fallthru
      _
    %136 = shalt.err (0)
    %s138 = sshll.u32 [#allocation2], 4
    %s139 = int_to_ptr.vmem [resolvable:$true] %s138
    %141 = dma.hbm_to_vmem [thread:$0]  %s130, 16, %s139, [#allocation3]
    %s142 = sld [smem:[#allocation4 + $0x1]]
    %s143 = smul.addr %s142, 16
    %s144 = scalar_lea.hbm %s1, %s143
    %s145 = scalar_lea.vmem [#allocation2], 1
    %s146 = scalar_lea.sflag [#allocation3], 1
    // Predicated region
    $region70: #{tpu_custom_call.1} parent=1 // pred_check
      _
    $region71: #{tpu_custom_call.1} parent=1 // pred_check_branch
      %148 = sbr.rel target = $region73
    $region72: #{tpu_custom_call.1} parent=1 // pred_region
      %149 = sst [smem:[#allocation23]] [#allocation26]
      %150 = sst [smem:[#allocation24]] [#allocation25]
    $region73: #{tpu_custom_call.1} parent=1 // pred_fallthru
      _
    %152 = shalt.err (0)
    %s154 = sshll.u32 %s145, 4
    %s155 = int_to_ptr.vmem [resolvable:$true] %s154
    %157 = dma.hbm_to_vmem [thread:$0]  %s144, 16, %s155, %s146
    %s158 = sld [smem:[#allocation4 + $0x2]]
    %s159 = smul.addr %s158, 16
    %s160 = scalar_lea.hbm %s1, %s159
    %s161 = scalar_lea.vmem [#allocation2], 2
    %s162 = scalar_lea.sflag [#allocation3], 2
    // Predicated region
    $region74: #{tpu_custom_call.1} parent=1 // pred_check
      _
    $region75: #{tpu_custom_call.1} parent=1 // pred_check_branch
      %164 = sbr.rel target = $region77
    $region76: #{tpu_custom_call.1} parent=1 // pred_region
      %165 = sst [smem:[#allocation23]] [#allocation28]
      %166 = sst [smem:[#allocation24]] [#allocation27]
    $region77: #{tpu_custom_call.1} parent=1 // pred_fallthru
      _
    %168 = shalt.err (0)
    %s170 = sshll.u32 %s161, 4
    %s171 = int_to_ptr.vmem [resolvable:$true] %s170
    %173 = dma.hbm_to_vmem [thread:$0]  %s160, 16, %s171, %s162
    %s174 = sld [smem:[#allocation4 + $0x3]]
    %s175 = smul.addr %s174, 16
    %s176 = scalar_lea.hbm %s1, %s175
    %s177 = scalar_lea.vmem [#allocation2], 3
    %s178 = scalar_lea.sflag [#allocation3], 3
    // Predicated region
    $region78: #{tpu_custom_call.1} parent=1 // pred_check
      _
    $region79: #{tpu_custom_call.1} parent=1 // pred_check_branch
      %180 = sbr.rel target = $region81
    $region80: #{tpu_custom_call.1} parent=1 // pred_region
      %181 = sst [smem:[#allocation23]] [#allocation30]
      %182 = sst [smem:[#allocation24]] [#allocation29]
    $region81: #{tpu_custom_call.1} parent=1 // pred_fallthru
      _
    %184 = shalt.err (0)
    %s186 = sshll.u32 %s177, 4
    %s187 = int_to_ptr.vmem [resolvable:$true] %s186
    %189 = dma.hbm_to_vmem [thread:$0]  %s176, 16, %s187, %s178
    %s190 = sld [smem:[#allocation4 + $0x4]]
    %s191 = smul.addr %s190, 16
    %s192 = scalar_lea.hbm %s1, %s191
    %s193 = scalar_lea.vmem [#allocation2], 4
    %s194 = scalar_lea.sflag [#allocation3], 4
    // Predicated region
    $region82: #{tpu_custom_call.1} parent=1 // pred_check
      _
    $region83: #{tpu_custom_call.1} parent=1 // pred_check_branch
      %196 = sbr.rel target = $region85
    $region84: #{tpu_custom_call.1} parent=1 // pred_region
      %197 = sst [smem:[#allocation23]] [#allocation32]
      %198 = sst [smem:[#allocation24]] [#allocation31]
    $region85: #{tpu_custom_call.1} parent=1 // pred_fallthru
      _
    %200 = shalt.err (0)
    %s202 = sshll.u32 %s193, 4
    %s203 = int_to_ptr.vmem [resolvable:$true] %s202
    %205 = dma.hbm_to_vmem [thread:$0]  %s192, 16, %s203, %s194
    %s206 = sld [smem:[#allocation4 + $0x5]]
    %s207 = smul.addr %s206, 16
    %s208 = scalar_lea.hbm %s1, %s207
    %s209 = scalar_lea.vmem [#allocation2], 5
    %s210 = scalar_lea.sflag [#allocation3], 5
    // Predicated region
    $region86: #{tpu_custom_call.1} parent=1 // pred_check
      _
    $region87: #{tpu_custom_call.1} parent=1 // pred_check_branch
      %212 = sbr.rel target = $region89
    $region88: #{tpu_custom_call.1} parent=1 // pred_region
      %213 = sst [smem:[#allocation23]] [#allocation34]
      %214 = sst [smem:[#allocation24]] [#allocation33]
    $region89: #{tpu_custom_call.1} parent=1 // pred_fallthru
      _
    %216 = shalt.err (0)
    %s218 = sshll.u32 %s209, 4
    %s219 = int_to_ptr.vmem [resolvable:$true] %s218
    %221 = dma.hbm_to_vmem [thread:$0]  %s208, 16, %s219, %s210
    %s222 = sld [smem:[#allocation4 + $0x6]]
    %s223 = smul.addr %s222, 16
    %s224 = scalar_lea.hbm %s1, %s223
    %s225 = scalar_lea.vmem [#allocation2], 6
    %s226 = scalar_lea.sflag [#allocation3], 6
    // Predicated region
    $region90: #{tpu_custom_call.1} parent=1 // pred_check
      _
    $region91: #{tpu_custom_call.1} parent=1 // pred_check_branch
      %228 = sbr.rel target = $region93
    $region92: #{tpu_custom_call.1} parent=1 // pred_region
      %229 = sst [smem:[#allocation23]] [#allocation36]
      %230 = sst [smem:[#allocation24]] [#allocation35]
    $region93: #{tpu_custom_call.1} parent=1 // pred_fallthru
      _
    %232 = shalt.err (0)
    %s234 = sshll.u32 %s225, 4
    %s235 = int_to_ptr.vmem [resolvable:$true] %s234
    %237 = dma.hbm_to_vmem [thread:$0]  %s224, 16, %s235, %s226
    %s238 = sld [smem:[#allocation4 + $0x7]]
    %s239 = smul.addr %s238, 16
    %s240 = scalar_lea.hbm %s1, %s239
    %s241 = scalar_lea.vmem [#allocation2], 7
    %s242 = scalar_lea.sflag [#allocation3], 7
    // Predicated region
    $region94: #{tpu_custom_call.1} parent=1 // pred_check
      _
    $region95: #{tpu_custom_call.1} parent=1 // pred_check_branch
      %244 = sbr.rel target = $region97
    $region96: #{tpu_custom_call.1} parent=1 // pred_region
      %245 = sst [smem:[#allocation23]] [#allocation38]
      %246 = sst [smem:[#allocation24]] [#allocation37]
    $region97: #{tpu_custom_call.1} parent=1 // pred_fallthru
      _
    %248 = shalt.err (0)
    %s250 = sshll.u32 %s241, 4
    %s251 = int_to_ptr.vmem [resolvable:$true] %s250
    %253 = dma.hbm_to_vmem [thread:$0]  %s240, 16, %s251, %s242
    %s254 = smul.u32 1, 1
    %s255 = sshll.u32 %s254, 4
    %256 = dma.done [#allocation3], %s255
    %s257 = sshll.u32 %s254, 4
    %258 = dma.done %s146, %s257
    %s259 = sshll.u32 %s254, 4
    %260 = dma.done %s162, %s259
    %s261 = sshll.u32 %s254, 4
    %262 = dma.done %s178, %s261
    %s263 = sshll.u32 %s254, 4
    %264 = dma.done %s194, %s263
    %s265 = sshll.u32 %s254, 4
    %266 = dma.done %s210, %s265
    %s267 = sshll.u32 %s254, 4
    %268 = dma.done %s226, %s267
    %s269 = sshll.u32 %s254, 4
    %270 = dma.done %s242, %s269
    %v271 = vld [vmem:[#allocation2] sm:$0xff]
    %v272 = vpack.c.bf16 %v271, %v271
    %v273 = vld [vmem:[%s8] sm:$0xff]
    %v274 = vld [vmem:[%s9] sm:$0xff]
    %v275 = vld [vmem:[#allocation8] sm:$0xff]
    %v276 = vld [vmem:[#allocation8 + $0x8] sm:$0xff]
    %v277 = vld [vmem:[#allocation8 + $0x10] sm:$0xff]
    %v278 = vld [vmem:[#allocation8 + $0x18] sm:$0xff]
    %v279 = vld [vmem:[#allocation8 + $0x20] sm:$0xff]
    %v280 = vld [vmem:[#allocation8 + $0x28] sm:$0xff]
    %v281 = vld [vmem:[#allocation8 + $0x30] sm:$0xff]
    %v282 = vld [vmem:[#allocation8 + $0x38] sm:$0xff]
    %v283 = vld [vmem:[#allocation8 + $0x40] sm:$0xff]
    %v284 = vld [vmem:[#allocation8 + $0x48] sm:$0xff]
    %v285 = vld [vmem:[#allocation8 + $0x50] sm:$0xff]
    %v286 = vld [vmem:[#allocation8 + $0x58] sm:$0xff]
    %v287 = vld [vmem:[#allocation8 + $0x60] sm:$0xff]
    %v288 = vld [vmem:[#allocation8 + $0x68] sm:$0xff]
    %v289 = vld [vmem:[#allocation8 + $0x70] sm:$0xff]
    %v290 = vld [vmem:[#allocation8 + $0x78] sm:$0xff]
    %v291 = vld [vmem:[#allocation8 + $0x80] sm:$0xff]
    %v292 = vld [vmem:[#allocation8 + $0x88] sm:$0xff]
    %v293 = vld [vmem:[#allocation8 + $0x90] sm:$0xff]
    %v294 = vld [vmem:[#allocation8 + $0x98] sm:$0xff]
    %v295 = vld [vmem:[#allocation8 + $0xa0] sm:$0xff]
    %v296 = vld [vmem:[#allocation8 + $0xa8] sm:$0xff]
    %v297 = vld [vmem:[#allocation8 + $0xb0] sm:$0xff]
    %v298 = vld [vmem:[#allocation8 + $0xb8] sm:$0xff]
    %v299 = vld [vmem:[#allocation8 + $0xc0] sm:$0xff]
    %v300 = vld [vmem:[#allocation8 + $0xc8] sm:$0xff]
    %v301 = vld [vmem:[#allocation8 + $0xd0] sm:$0xff]
    %v302 = vld [vmem:[#allocation8 + $0xd8] sm:$0xff]
    %v303 = vld [vmem:[#allocation8 + $0xe0] sm:$0xff]
    %v304 = vld [vmem:[#allocation8 + $0xe8] sm:$0xff]
    %v305 = vld [vmem:[#allocation8 + $0xf0] sm:$0xff]
    %v306 = vld [vmem:[#allocation8 + $0xf8] sm:$0xff]
    %v307 = vpack.c.bf16 %v273, %v273
    %v308 = vld [vmem:[#allocation11] sm:$0xff]
    %v309 = vld [vmem:[#allocation11 + $0x8] sm:$0xff]
    %v310 = vld [vmem:[#allocation11 + $0x10] sm:$0xff]
    %v311 = vld [vmem:[#allocation11 + $0x18] sm:$0xff]
    %v312 = vld [vmem:[#allocation11 + $0x20] sm:$0xff]
    %v313 = vld [vmem:[#allocation11 + $0x28] sm:$0xff]
    %v314 = vld [vmem:[#allocation11 + $0x30] sm:$0xff]
    %v315 = vld [vmem:[#allocation11 + $0x38] sm:$0xff]
    %v316 = vld [vmem:[#allocation11 + $0x40] sm:$0xff]
    %v317 = vld [vmem:[#allocation11 + $0x48] sm:$0xff]
    %v318 = vld [vmem:[#allocation11 + $0x50] sm:$0xff]
    %v319 = vld [vmem:[#allocation11 + $0x58] sm:$0xff]
    %v320 = vld [vmem:[#allocation11 + $0x60] sm:$0xff]
    %v321 = vld [vmem:[#allocation11 + $0x68] sm:$0xff]
    %v322 = vld [vmem:[#allocation11 + $0x70] sm:$0xff]
    %v323 = vld [vmem:[#allocation11 + $0x78] sm:$0xff]
    %v324 = vld [vmem:[#allocation11 + $0x80] sm:$0xff]
    %v325 = vld [vmem:[#allocation11 + $0x88] sm:$0xff]
    %v326 = vld [vmem:[#allocation11 + $0x90] sm:$0xff]
    %v327 = vld [vmem:[#allocation11 + $0x98] sm:$0xff]
    %v328 = vld [vmem:[#allocation11 + $0xa0] sm:$0xff]
    %v329 = vld [vmem:[#allocation11 + $0xa8] sm:$0xff]
    %v330 = vld [vmem:[#allocation11 + $0xb0] sm:$0xff]
    %v331 = vld [vmem:[#allocation11 + $0xb8] sm:$0xff]
    %v332 = vld [vmem:[#allocation11 + $0xc0] sm:$0xff]
    %v333 = vld [vmem:[#allocation11 + $0xc8] sm:$0xff]
    %v334 = vld [vmem:[#allocation11 + $0xd0] sm:$0xff]
    %v335 = vld [vmem:[#allocation11 + $0xd8] sm:$0xff]
    %v336 = vld [vmem:[#allocation11 + $0xe0] sm:$0xff]
    %v337 = vld [vmem:[#allocation11 + $0xe8] sm:$0xff]
    %v338 = vld [vmem:[#allocation11 + $0xf0] sm:$0xff]
    %v339 = vld [vmem:[#allocation11 + $0xf8] sm:$0xff]
    %v372 = vunpack.c.l.b16 %v308
    %v373 = vunpack.c.h.b16 %v308
    %v374 = vunpack.c.l.b16 %v309
    %v375 = vunpack.c.h.b16 %v309
    %v376 = vunpack.c.l.b16 %v310
    %v377 = vunpack.c.h.b16 %v310
    %v378 = vunpack.c.l.b16 %v311
    %v379 = vunpack.c.h.b16 %v311
    %v380 = vunpack.c.l.b16 %v312
    %v381 = vunpack.c.h.b16 %v312
    %v382 = vunpack.c.l.b16 %v313
    %v383 = vunpack.c.h.b16 %v313
    %v384 = vunpack.c.l.b16 %v314
    %v385 = vunpack.c.h.b16 %v314
    %v386 = vunpack.c.l.b16 %v315
    %v387 = vunpack.c.h.b16 %v315
    %v388 = vunpack.c.l.b16 %v316
    %v389 = vunpack.c.h.b16 %v316
    %v390 = vunpack.c.l.b16 %v317
    %v391 = vunpack.c.h.b16 %v317
    %v392 = vunpack.c.l.b16 %v318
    %v393 = vunpack.c.h.b16 %v318
    %v394 = vunpack.c.l.b16 %v319
    %v395 = vunpack.c.h.b16 %v319
    %v396 = vunpack.c.l.b16 %v320
    %v397 = vunpack.c.h.b16 %v320
    %v398 = vunpack.c.l.b16 %v321
    %v399 = vunpack.c.h.b16 %v321
    %v400 = vunpack.c.l.b16 %v322
    %v401 = vunpack.c.h.b16 %v322
    %v402 = vunpack.c.l.b16 %v323
    %v403 = vunpack.c.h.b16 %v323
    %v404 = vunpack.c.l.b16 %v324
    %v405 = vunpack.c.h.b16 %v324
    %v406 = vunpack.c.l.b16 %v325
    %v407 = vunpack.c.h.b16 %v325
    %v408 = vunpack.c.l.b16 %v326
    %v409 = vunpack.c.h.b16 %v326
    %v410 = vunpack.c.l.b16 %v327
    %v411 = vunpack.c.h.b16 %v327
    %v412 = vunpack.c.l.b16 %v328
    %v413 = vunpack.c.h.b16 %v328
    %v414 = vunpack.c.l.b16 %v329
    %v415 = vunpack.c.h.b16 %v329
    %v416 = vunpack.c.l.b16 %v330
    %v417 = vunpack.c.h.b16 %v330
    %v418 = vunpack.c.l.b16 %v331
    %v419 = vunpack.c.h.b16 %v331
    %v420 = vunpack.c.l.b16 %v332
    %v421 = vunpack.c.h.b16 %v332
    %v422 = vunpack.c.l.b16 %v333
    %v423 = vunpack.c.h.b16 %v333
    %v424 = vunpack.c.l.b16 %v334
    %v425 = vunpack.c.h.b16 %v334
    %v426 = vunpack.c.l.b16 %v335
    %v427 = vunpack.c.h.b16 %v335
    %v428 = vunpack.c.l.b16 %v336
    %v429 = vunpack.c.h.b16 %v336
    %v430 = vunpack.c.l.b16 %v337
    %v431 = vunpack.c.h.b16 %v337
    %v432 = vunpack.c.l.b16 %v338
    %v433 = vunpack.c.h.b16 %v338
    %v434 = vunpack.c.l.b16 %v339
    %v435 = vunpack.c.h.b16 %v339
    %v436 = vpack.c.b16 %v376, %v372
    %v437 = vpack.c.b16 %v377, %v373
    %v438 = vpack.c.b16 %v378, %v374
    %v439 = vpack.c.b16 %v379, %v375
    %v440 = vpack.c.b16 %v384, %v380
    %v441 = vpack.c.b16 %v385, %v381
    %v442 = vpack.c.b16 %v386, %v382
    %v443 = vpack.c.b16 %v387, %v383
    %v444 = vpack.c.b16 %v392, %v388
    %v445 = vpack.c.b16 %v393, %v389
    %v446 = vpack.c.b16 %v394, %v390
    %v447 = vpack.c.b16 %v395, %v391
    %v448 = vpack.c.b16 %v400, %v396
    %v449 = vpack.c.b16 %v401, %v397
    %v450 = vpack.c.b16 %v402, %v398
    %v451 = vpack.c.b16 %v403, %v399
    %v452 = vpack.c.b16 %v408, %v404
    %v453 = vpack.c.b16 %v409, %v405
    %v454 = vpack.c.b16 %v410, %v406
    %v455 = vpack.c.b16 %v411, %v407
    %v456 = vpack.c.b16 %v416, %v412
    %v457 = vpack.c.b16 %v417, %v413
    %v458 = vpack.c.b16 %v418, %v414
    %v459 = vpack.c.b16 %v419, %v415
    %v460 = vpack.c.b16 %v424, %v420
    %v461 = vpack.c.b16 %v425, %v421
    %v462 = vpack.c.b16 %v426, %v422
    %v463 = vpack.c.b16 %v427, %v423
    %v464 = vpack.c.b16 %v432, %v428
    %v465 = vpack.c.b16 %v433, %v429
    %v466 = vpack.c.b16 %v434, %v430
    %v467 = vpack.c.b16 %v435, %v431
    %500 = vmatprep.subr.bf16.mxu0 %v437
    %501 = vmatpush1.bf16.msra.mxu0 %v436
    %502 = vmatprep.subr.bf16.mxu0 %v441
    %503 = vmatpush1.bf16.msra.mxu0 %v440
    %504 = vmatprep.subr.bf16.mxu0 %v445
    %505 = vmatpush1.bf16.msra.mxu0 %v444
    %506 = vmatprep.subr.bf16.mxu0 %v449
    %507 = vmatpush1.bf16.msra.mxu0 %v448
    %508 = vmatprep.subr.bf16.mxu0 %v453
    %509 = vmatpush1.bf16.msra.mxu0 %v452
    %510 = vmatprep.subr.bf16.mxu0 %v457
    %511 = vmatpush1.bf16.msra.mxu0 %v456
    %512 = vmatprep.subr.bf16.mxu0 %v461
    %513 = vmatpush1.bf16.msra.mxu0 %v460
    %514 = vmatprep.subr.bf16.mxu0 %v465
    %515 = vmatpush1.bf16.msra.mxu0 %v464
    %516 = vmatprep.subr.bf16.mxu0 0
    %517 = vmatpush1.bf16.msra.mxu0 0
    %518 = vmatprep.subr.bf16.mxu0 0
    %519 = vmatpush1.bf16.msra.mxu0 0
    %520 = vmatprep.subr.bf16.mxu0 0
    %521 = vmatpush1.bf16.msra.mxu0 0
    %522 = vmatprep.subr.bf16.mxu0 0
    %523 = vmatpush1.bf16.msra.mxu0 0
    %524 = vmatprep.subr.bf16.mxu0 0
    %525 = vmatpush1.bf16.msra.mxu0 0
    %526 = vmatprep.subr.bf16.mxu0 0
    %527 = vmatpush1.bf16.msra.mxu0 0
    %528 = vmatprep.subr.bf16.mxu0 0
    %529 = vmatpush1.bf16.msra.mxu0 0
    %530 = vmatprep.subr.bf16.mxu0 0
    %531 = vmatpush1.bf16.msra.mxu0 0
    %532 = vmatprep.mubr.bf16.mxu0 0
    %533 = vmatmul.mubr.bf16.gmra.mrb[0].mxu0 %v307
    %v534 = vpop.f32.mrb[0].mxu0
    %v535 = vadd.f32 0.0, %v534
    %v536 = vpop.f32.mrb[0].mxu0
    %v537 = vadd.f32 0.0, %v536
    %v538 = vpop.f32.mrb[0].mxu0
    %v539 = vpop.f32.mrb[0].mxu0
    %540 = vdwg.mxu0
    %541 = vmatprep.subr.bf16.mxu0 %v439
    %542 = vmatpush1.bf16.msra.mxu0 %v438
    %543 = vmatprep.subr.bf16.mxu0 %v443
    %544 = vmatpush1.bf16.msra.mxu0 %v442
    %545 = vmatprep.subr.bf16.mxu0 %v447
    %546 = vmatpush1.bf16.msra.mxu0 %v446
    %547 = vmatprep.subr.bf16.mxu0 %v451
    %548 = vmatpush1.bf16.msra.mxu0 %v450
    %549 = vmatprep.subr.bf16.mxu0 %v455
    %550 = vmatpush1.bf16.msra.mxu0 %v454
    %551 = vmatprep.subr.bf16.mxu0 %v459
    %552 = vmatpush1.bf16.msra.mxu0 %v458
    %553 = vmatprep.subr.bf16.mxu0 %v463
    %554 = vmatpush1.bf16.msra.mxu0 %v462
    %555 = vmatprep.subr.bf16.mxu0 %v467
    %556 = vmatpush1.bf16.msra.mxu0 %v466
    %557 = vmatprep.subr.bf16.mxu0 0
    %558 = vmatpush1.bf16.msra.mxu0 0
    %559 = vmatprep.subr.bf16.mxu0 0
    %560 = vmatpush1.bf16.msra.mxu0 0
    %561 = vmatprep.subr.bf16.mxu0 0
    %562 = vmatpush1.bf16.msra.mxu0 0
    %563 = vmatprep.subr.bf16.mxu0 0
    %564 = vmatpush1.bf16.msra.mxu0 0
    %565 = vmatprep.subr.bf16.mxu0 0
    %566 = vmatpush1.bf16.msra.mxu0 0
    %567 = vmatprep.subr.bf16.mxu0 0
    %568 = vmatpush1.bf16.msra.mxu0 0
    %569 = vmatprep.subr.bf16.mxu0 0
    %570 = vmatpush1.bf16.msra.mxu0 0
    %571 = vmatprep.subr.bf16.mxu0 0
    %572 = vmatpush1.bf16.msra.mxu0 0
    %573 = vmatprep.mubr.bf16.mxu0 0
    %574 = vmatmul.mubr.bf16.gmra.mrb[0].mxu0 %v307
    %v575 = vpop.f32.mrb[0].mxu0
    %v576 = vadd.f32 0.0, %v575
    %v577 = vpop.f32.mrb[0].mxu0
    %v578 = vadd.f32 0.0, %v577
    %v579 = vpop.f32.mrb[0].mxu0
    %v580 = vpop.f32.mrb[0].mxu0
    %581 = vdwg.mxu0
    %v614 = vunpack.c.l.b16 %v275
    %v615 = vunpack.c.h.b16 %v275
    %v616 = vunpack.c.l.b16 %v276
    %v617 = vunpack.c.h.b16 %v276
    %v618 = vunpack.c.l.b16 %v277
    %v619 = vunpack.c.h.b16 %v277
    %v620 = vunpack.c.l.b16 %v278
    %v621 = vunpack.c.h.b16 %v278
    %v622 = vunpack.c.l.b16 %v279
    %v623 = vunpack.c.h.b16 %v279
    %v624 = vunpack.c.l.b16 %v280
    %v625 = vunpack.c.h.b16 %v280
    %v626 = vunpack.c.l.b16 %v281
    %v627 = vunpack.c.h.b16 %v281
    %v628 = vunpack.c.l.b16 %v282
    %v629 = vunpack.c.h.b16 %v282
    %v630 = vunpack.c.l.b16 %v283
    %v631 = vunpack.c.h.b16 %v283
    %v632 = vunpack.c.l.b16 %v284
    %v633 = vunpack.c.h.b16 %v284
    %v634 = vunpack.c.l.b16 %v285
    %v635 = vunpack.c.h.b16 %v285
    %v636 = vunpack.c.l.b16 %v286
    %v637 = vunpack.c.h.b16 %v286
    %v638 = vunpack.c.l.b16 %v287
    %v639 = vunpack.c.h.b16 %v287
    %v640 = vunpack.c.l.b16 %v288
    %v641 = vunpack.c.h.b16 %v288
    %v642 = vunpack.c.l.b16 %v289
    %v643 = vunpack.c.h.b16 %v289
    %v644 = vunpack.c.l.b16 %v290
    %v645 = vunpack.c.h.b16 %v290
    %v646 = vunpack.c.l.b16 %v291
    %v647 = vunpack.c.h.b16 %v291
    %v648 = vunpack.c.l.b16 %v292
    %v649 = vunpack.c.h.b16 %v292
    %v650 = vunpack.c.l.b16 %v293
    %v651 = vunpack.c.h.b16 %v293
    %v652 = vunpack.c.l.b16 %v294
    %v653 = vunpack.c.h.b16 %v294
    %v654 = vunpack.c.l.b16 %v295
    %v655 = vunpack.c.h.b16 %v295
    %v656 = vunpack.c.l.b16 %v296
    %v657 = vunpack.c.h.b16 %v296
    %v658 = vunpack.c.l.b16 %v297
    %v659 = vunpack.c.h.b16 %v297
    %v660 = vunpack.c.l.b16 %v298
    %v661 = vunpack.c.h.b16 %v298
    %v662 = vunpack.c.l.b16 %v299
    %v663 = vunpack.c.h.b16 %v299
    %v664 = vunpack.c.l.b16 %v300
    %v665 = vunpack.c.h.b16 %v300
    %v666 = vunpack.c.l.b16 %v301
    %v667 = vunpack.c.h.b16 %v301
    %v668 = vunpack.c.l.b16 %v302
    %v669 = vunpack.c.h.b16 %v302
    %v670 = vunpack.c.l.b16 %v303
    %v671 = vunpack.c.h.b16 %v303
    %v672 = vunpack.c.l.b16 %v304
    %v673 = vunpack.c.h.b16 %v304
    %v674 = vunpack.c.l.b16 %v305
    %v675 = vunpack.c.h.b16 %v305
    %v676 = vunpack.c.l.b16 %v306
    %v677 = vunpack.c.h.b16 %v306
    %v678 = vpack.c.b16 %v618, %v614
    %v679 = vpack.c.b16 %v619, %v615
    %v680 = vpack.c.b16 %v620, %v616
    %v681 = vpack.c.b16 %v621, %v617
    %v682 = vpack.c.b16 %v626, %v622
    %v683 = vpack.c.b16 %v627, %v623
    %v684 = vpack.c.b16 %v628, %v624
    %v685 = vpack.c.b16 %v629, %v625
    %v686 = vpack.c.b16 %v634, %v630
    %v687 = vpack.c.b16 %v635, %v631
    %v688 = vpack.c.b16 %v636, %v632
    %v689 = vpack.c.b16 %v637, %v633
    %v690 = vpack.c.b16 %v642, %v638
    %v691 = vpack.c.b16 %v643, %v639
    %v692 = vpack.c.b16 %v644, %v640
    %v693 = vpack.c.b16 %v645, %v641
    %v694 = vpack.c.b16 %v650, %v646
    %v695 = vpack.c.b16 %v651, %v647
    %v696 = vpack.c.b16 %v652, %v648
    %v697 = vpack.c.b16 %v653, %v649
    %v698 = vpack.c.b16 %v658, %v654
    %v699 = vpack.c.b16 %v659, %v655
    %v700 = vpack.c.b16 %v660, %v656
    %v701 = vpack.c.b16 %v661, %v657
    %v702 = vpack.c.b16 %v666, %v662
    %v703 = vpack.c.b16 %v667, %v663
    %v704 = vpack.c.b16 %v668, %v664
    %v705 = vpack.c.b16 %v669, %v665
    %v706 = vpack.c.b16 %v674, %v670
    %v707 = vpack.c.b16 %v675, %v671
    %v708 = vpack.c.b16 %v676, %v672
    %v709 = vpack.c.b16 %v677, %v673
    %742 = vmatprep.subr.bf16.mxu0 %v679
    %743 = vmatpush1.bf16.msra.mxu0 %v678
    %744 = vmatprep.subr.bf16.mxu0 %v683
    %745 = vmatpush1.bf16.msra.mxu0 %v682
    %746 = vmatprep.subr.bf16.mxu0 %v687
    %747 = vmatpush1.bf16.msra.mxu0 %v686
    %748 = vmatprep.subr.bf16.mxu0 %v691
    %749 = vmatpush1.bf16.msra.mxu0 %v690
    %750 = vmatprep.subr.bf16.mxu0 %v695
    %751 = vmatpush1.bf16.msra.mxu0 %v694
    %752 = vmatprep.subr.bf16.mxu0 %v699
    %753 = vmatpush1.bf16.msra.mxu0 %v698
    %754 = vmatprep.subr.bf16.mxu0 %v703
    %755 = vmatpush1.bf16.msra.mxu0 %v702
    %756 = vmatprep.subr.bf16.mxu0 %v707
    %757 = vmatpush1.bf16.msra.mxu0 %v706
    %758 = vmatprep.subr.bf16.mxu0 0
    %759 = vmatpush1.bf16.msra.mxu0 0
    %760 = vmatprep.subr.bf16.mxu0 0
    %761 = vmatpush1.bf16.msra.mxu0 0
    %762 = vmatprep.subr.bf16.mxu0 0
    %763 = vmatpush1.bf16.msra.mxu0 0
    %764 = vmatprep.subr.bf16.mxu0 0
    %765 = vmatpush1.bf16.msra.mxu0 0
    %766 = vmatprep.subr.bf16.mxu0 0
    %767 = vmatpush1.bf16.msra.mxu0 0
    %768 = vmatprep.subr.bf16.mxu0 0
    %769 = vmatpush1.bf16.msra.mxu0 0
    %770 = vmatprep.subr.bf16.mxu0 0
    %771 = vmatpush1.bf16.msra.mxu0 0
    %772 = vmatprep.subr.bf16.mxu0 0
    %773 = vmatpush1.bf16.msra.mxu0 0
    %774 = vmatprep.mubr.bf16.mxu0 0
    %775 = vmatmul.mubr.bf16.gmra.mrb[0].mxu0 %v272
    %v776 = vpop.f32.mrb[0].mxu0
    %v777 = vadd.f32 %v535, %v776
    %v778 = vpop.f32.mrb[0].mxu0
    %v779 = vadd.f32 %v537, %v778
    %v780 = vpop.f32.mrb[0].mxu0
    %v781 = vpop.f32.mrb[0].mxu0
    %782 = vdwg.mxu0
    %783 = vmatprep.subr.bf16.mxu0 %v681
    %784 = vmatpush1.bf16.msra.mxu0 %v680
    %785 = vmatprep.subr.bf16.mxu0 %v685
    %786 = vmatpush1.bf16.msra.mxu0 %v684
    %787 = vmatprep.subr.bf16.mxu0 %v689
    %788 = vmatpush1.bf16.msra.mxu0 %v688
    %789 = vmatprep.subr.bf16.mxu0 %v693
    %790 = vmatpush1.bf16.msra.mxu0 %v692
    %791 = vmatprep.subr.bf16.mxu0 %v697
    %792 = vmatpush1.bf16.msra.mxu0 %v696
    %793 = vmatprep.subr.bf16.mxu0 %v701
    %794 = vmatpush1.bf16.msra.mxu0 %v700
    %795 = vmatprep.subr.bf16.mxu0 %v705
    %796 = vmatpush1.bf16.msra.mxu0 %v704
    %797 = vmatprep.subr.bf16.mxu0 %v709
    %798 = vmatpush1.bf16.msra.mxu0 %v708
    %799 = vmatprep.subr.bf16.mxu0 0
    %800 = vmatpush1.bf16.msra.mxu0 0
    %801 = vmatprep.subr.bf16.mxu0 0
    %802 = vmatpush1.bf16.msra.mxu0 0
    %803 = vmatprep.subr.bf16.mxu0 0
    %804 = vmatpush1.bf16.msra.mxu0 0
    %805 = vmatprep.subr.bf16.mxu0 0
    %806 = vmatpush1.bf16.msra.mxu0 0
    %807 = vmatprep.subr.bf16.mxu0 0
    %808 = vmatpush1.bf16.msra.mxu0 0
    %809 = vmatprep.subr.bf16.mxu0 0
    %810 = vmatpush1.bf16.msra.mxu0 0
    %811 = vmatprep.subr.bf16.mxu0 0
    %812 = vmatpush1.bf16.msra.mxu0 0
    %813 = vmatprep.subr.bf16.mxu0 0
    %814 = vmatpush1.bf16.msra.mxu0 0
    %815 = vmatprep.mubr.bf16.mxu0 0
    %816 = vmatmul.mubr.bf16.gmra.mrb[0].mxu0 %v272
    %v817 = vpop.f32.mrb[0].mxu0
    %v818 = vadd.f32 %v576, %v817
    %v819 = vpop.f32.mrb[0].mxu0
    %v820 = vadd.f32 %v578, %v819
    %v821 = vpop.f32.mrb[0].mxu0
    %v822 = vpop.f32.mrb[0].mxu0
    %823 = vdwg.mxu0
    %v824 = vld [vmem:[#allocation14] sm:$0xf]
    %v826 = vlaneseq
    %v827 = vshrl.u32 %v826, 7
    %v828 = vsub.s32 0, %v827
    %v829 = vrot.slane %v824, %v828
    %v830 = vlaneseq
    %v831 = vshrl.u32 %v830, 7
    %v832 = vsub.s32 1, %v831
    %v833 = vrot.slane %v824, %v832
    %v834 = vlaneseq
    %v835 = vshrl.u32 %v834, 7
    %v836 = vsub.s32 2, %v835
    %v837 = vrot.slane %v824, %v836
    %v838 = vlaneseq
    %v839 = vshrl.u32 %v838, 7
    %v840 = vsub.s32 3, %v839
    %v841 = vrot.slane %v824, %v840
    %v846 = vadd.f32 %v777, %v829
    %v847 = vadd.f32 %v779, %v833
    %v848 = vadd.f32 %v818, %v837
    %v849 = vadd.f32 %v820, %v841
    %v850 = vxor.u32 %v846, 2147483648
    %v851 = vmul.f32 %v850, 1.442695
    %v852 = vpow.pop %v851
    %v853 = vadd.f32 %v852, 1.0
    %v854 = vrcp.pop %v853
    %v855 = vmul.f32 1.0, %v854
    %v856 = vxor.u32 %v847, 2147483648
    %v857 = vmul.f32 %v856, 1.442695
    %v858 = vpow.pop %v857
    %v859 = vadd.f32 %v858, 1.0
    %v860 = vrcp.pop %v859
    %v861 = vmul.f32 1.0, %v860
    %v862 = vtanh.pop %v848
    %v863 = vxor.u32 %v849, 2147483648
    %v864 = vmul.f32 %v863, 1.442695
    %v865 = vpow.pop %v864
    %v866 = vadd.f32 %v865, 1.0
    %v867 = vrcp.pop %v866
    %v868 = vmul.f32 1.0, %v867
    %v869 = vmul.f32 %v861, %v274
    %v870 = vmul.f32 %v855, %v862
    %v871 = vadd.f32 %v869, %v870
    %v872 = vtanh.pop %v871
    %v873 = vmul.f32 %v868, %v872
    %874 = vst [vmem:[#allocation18] sm:$0xff] %v873
    %875 = vst [vmem:[#allocation20] sm:$0xff] %v871
    %v876 = vpack.c.bf16 %v873, %v873
    %s877 = scalar_lea.vmem %s8, 8
    %v878 = vld [vmem:[%s877] sm:$0xff]
    %s879 = scalar_lea.vmem %s9, 8
    %v880 = vld [vmem:[%s879] sm:$0xff]
    %v881 = vld [vmem:[#allocation9] sm:$0xff]
    %v882 = vld [vmem:[#allocation9 + $0x8] sm:$0xff]
    %v883 = vld [vmem:[#allocation9 + $0x10] sm:$0xff]
    %v884 = vld [vmem:[#allocation9 + $0x18] sm:$0xff]
    %v885 = vld [vmem:[#allocation9 + $0x20] sm:$0xff]
    %v886 = vld [vmem:[#allocation9 + $0x28] sm:$0xff]
    %v887 = vld [vmem:[#allocation9 + $0x30] sm:$0xff]
    %v888 = vld [vmem:[#allocation9 + $0x38] sm:$0xff]
    %v889 = vld [vmem:[#allocation9 + $0x40] sm:$0xff]
    %v890 = vld [vmem:[#allocation9 + $0x48] sm:$0xff]
    %v891 = vld [vmem:[#allocation9 + $0x50] sm:$0xff]
    %v892 = vld [vmem:[#allocation9 + $0x58] sm:$0xff]
    %v893 = vld [vmem:[#allocation9 + $0x60] sm:$0xff]
    %v894 = vld [vmem:[#allocation9 + $0x68] sm:$0xff]
    %v895 = vld [vmem:[#allocation9 + $0x70] sm:$0xff]
    %v896 = vld [vmem:[#allocation9 + $0x78] sm:$0xff]
    %v897 = vld [vmem:[#allocation9 + $0x80] sm:$0xff]
    %v898 = vld [vmem:[#allocation9 + $0x88] sm:$0xff]
    %v899 = vld [vmem:[#allocation9 + $0x90] sm:$0xff]
    %v900 = vld [vmem:[#allocation9 + $0x98] sm:$0xff]
    %v901 = vld [vmem:[#allocation9 + $0xa0] sm:$0xff]
    %v902 = vld [vmem:[#allocation9 + $0xa8] sm:$0xff]
    %v903 = vld [vmem:[#allocation9 + $0xb0] sm:$0xff]
    %v904 = vld [vmem:[#allocation9 + $0xb8] sm:$0xff]
    %v905 = vld [vmem:[#allocation9 + $0xc0] sm:$0xff]
    %v906 = vld [vmem:[#allocation9 + $0xc8] sm:$0xff]
    %v907 = vld [vmem:[#allocation9 + $0xd0] sm:$0xff]
    %v908 = vld [vmem:[#allocation9 + $0xd8] sm:$0xff]
    %v909 = vld [vmem:[#allocation9 + $0xe0] sm:$0xff]
    %v910 = vld [vmem:[#allocation9 + $0xe8] sm:$0xff]
    %v911 = vld [vmem:[#allocation9 + $0xf0] sm:$0xff]
    %v912 = vld [vmem:[#allocation9 + $0xf8] sm:$0xff]
    %v913 = vpack.c.bf16 %v878, %v878
    %v914 = vld [vmem:[#allocation12] sm:$0xff]
    %v915 = vld [vmem:[#allocation12 + $0x8] sm:$0xff]
    %v916 = vld [vmem:[#allocation12 + $0x10] sm:$0xff]
    %v917 = vld [vmem:[#allocation12 + $0x18] sm:$0xff]
    %v918 = vld [vmem:[#allocation12 + $0x20] sm:$0xff]
    %v919 = vld [vmem:[#allocation12 + $0x28] sm:$0xff]
    %v920 = vld [vmem:[#allocation12 + $0x30] sm:$0xff]
    %v921 = vld [vmem:[#allocation12 + $0x38] sm:$0xff]
    %v922 = vld [vmem:[#allocation12 + $0x40] sm:$0xff]
    %v923 = vld [vmem:[#allocation12 + $0x48] sm:$0xff]
    %v924 = vld [vmem:[#allocation12 + $0x50] sm:$0xff]
    %v925 = vld [vmem:[#allocation12 + $0x58] sm:$0xff]
    %v926 = vld [vmem:[#allocation12 + $0x60] sm:$0xff]
    %v927 = vld [vmem:[#allocation12 + $0x68] sm:$0xff]
    %v928 = vld [vmem:[#allocation12 + $0x70] sm:$0xff]
    %v929 = vld [vmem:[#allocation12 + $0x78] sm:$0xff]
    %v930 = vld [vmem:[#allocation12 + $0x80] sm:$0xff]
    %v931 = vld [vmem:[#allocation12 + $0x88] sm:$0xff]
    %v932 = vld [vmem:[#allocation12 + $0x90] sm:$0xff]
    %v933 = vld [vmem:[#allocation12 + $0x98] sm:$0xff]
    %v934 = vld [vmem:[#allocation12 + $0xa0] sm:$0xff]
    %v935 = vld [vmem:[#allocation12 + $0xa8] sm:$0xff]
    %v936 = vld [vmem:[#allocation12 + $0xb0] sm:$0xff]
    %v937 = vld [vmem:[#allocation12 + $0xb8] sm:$0xff]
    %v938 = vld [vmem:[#allocation12 + $0xc0] sm:$0xff]
    %v939 = vld [vmem:[#allocation12 + $0xc8] sm:$0xff]
    %v940 = vld [vmem:[#allocation12 + $0xd0] sm:$0xff]
    %v941 = vld [vmem:[#allocation12 + $0xd8] sm:$0xff]
    %v942 = vld [vmem:[#allocation12 + $0xe0] sm:$0xff]
    %v943 = vld [vmem:[#allocation12 + $0xe8] sm:$0xff]
    %v944 = vld [vmem:[#allocation12 + $0xf0] sm:$0xff]
    %v945 = vld [vmem:[#allocation12 + $0xf8] sm:$0xff]
    %v978 = vunpack.c.l.b16 %v914
    %v979 = vunpack.c.h.b16 %v914
    %v980 = vunpack.c.l.b16 %v915
    %v981 = vunpack.c.h.b16 %v915
    %v982 = vunpack.c.l.b16 %v916
    %v983 = vunpack.c.h.b16 %v916
    %v984 = vunpack.c.l.b16 %v917
    %v985 = vunpack.c.h.b16 %v917
    %v986 = vunpack.c.l.b16 %v918
    %v987 = vunpack.c.h.b16 %v918
    %v988 = vunpack.c.l.b16 %v919
    %v989 = vunpack.c.h.b16 %v919
    %v990 = vunpack.c.l.b16 %v920
    %v991 = vunpack.c.h.b16 %v920
    %v992 = vunpack.c.l.b16 %v921
    %v993 = vunpack.c.h.b16 %v921
    %v994 = vunpack.c.l.b16 %v922
    %v995 = vunpack.c.h.b16 %v922
    %v996 = vunpack.c.l.b16 %v923
    %v997 = vunpack.c.h.b16 %v923
    %v998 = vunpack.c.l.b16 %v924
    %v999 = vunpack.c.h.b16 %v924
    %v1000 = vunpack.c.l.b16 %v925
    %v1001 = vunpack.c.h.b16 %v925
    %v1002 = vunpack.c.l.b16 %v926
    %v1003 = vunpack.c.h.b16 %v926
    %v1004 = vunpack.c.l.b16 %v927
    %v1005 = vunpack.c.h.b16 %v927
    %v1006 = vunpack.c.l.b16 %v928
    %v1007 = vunpack.c.h.b16 %v928
    %v1008 = vunpack.c.l.b16 %v929
    %v1009 = vunpack.c.h.b16 %v929
    %v1010 = vunpack.c.l.b16 %v930
    %v1011 = vunpack.c.h.b16 %v930
    %v1012 = vunpack.c.l.b16 %v931
    %v1013 = vunpack.c.h.b16 %v931
    %v1014 = vunpack.c.l.b16 %v932
    %v1015 = vunpack.c.h.b16 %v932
    %v1016 = vunpack.c.l.b16 %v933
    %v1017 = vunpack.c.h.b16 %v933
    %v1018 = vunpack.c.l.b16 %v934
    %v1019 = vunpack.c.h.b16 %v934
    %v1020 = vunpack.c.l.b16 %v935
    %v1021 = vunpack.c.h.b16 %v935
    %v1022 = vunpack.c.l.b16 %v936
    %v1023 = vunpack.c.h.b16 %v936
    %v1024 = vunpack.c.l.b16 %v937
    %v1025 = vunpack.c.h.b16 %v937
    %v1026 = vunpack.c.l.b16 %v938
    %v1027 = vunpack.c.h.b16 %v938
    %v1028 = vunpack.c.l.b16 %v939
    %v1029 = vunpack.c.h.b16 %v939
    %v1030 = vunpack.c.l.b16 %v940
    %v1031 = vunpack.c.h.b16 %v940
    %v1032 = vunpack.c.l.b16 %v941
    %v1033 = vunpack.c.h.b16 %v941
    %v1034 = vunpack.c.l.b16 %v942
    %v1035 = vunpack.c.h.b16 %v942
    %v1036 = vunpack.c.l.b16 %v943
    %v1037 = vunpack.c.h.b16 %v943
    %v1038 = vunpack.c.l.b16 %v944
    %v1039 = vunpack.c.h.b16 %v944
    %v1040 = vunpack.c.l.b16 %v945
    %v1041 = vunpack.c.h.b16 %v945
    %v1042 = vpack.c.b16 %v982, %v978
    %v1043 = vpack.c.b16 %v983, %v979
    %v1044 = vpack.c.b16 %v984, %v980
    %v1045 = vpack.c.b16 %v985, %v981
    %v1046 = vpack.c.b16 %v990, %v986
    %v1047 = vpack.c.b16 %v991, %v987
    %v1048 = vpack.c.b16 %v992, %v988
    %v1049 = vpack.c.b16 %v993, %v989
    %v1050 = vpack.c.b16 %v998, %v994
    %v1051 = vpack.c.b16 %v999, %v995
    %v1052 = vpack.c.b16 %v1000, %v996
    %v1053 = vpack.c.b16 %v1001, %v997
    %v1054 = vpack.c.b16 %v1006, %v1002
    %v1055 = vpack.c.b16 %v1007, %v1003
    %v1056 = vpack.c.b16 %v1008, %v1004
    %v1057 = vpack.c.b16 %v1009, %v1005
    %v1058 = vpack.c.b16 %v1014, %v1010
    %v1059 = vpack.c.b16 %v1015, %v1011
    %v1060 = vpack.c.b16 %v1016, %v1012
    %v1061 = vpack.c.b16 %v1017, %v1013
    %v1062 = vpack.c.b16 %v1022, %v1018
    %v1063 = vpack.c.b16 %v1023, %v1019
    %v1064 = vpack.c.b16 %v1024, %v1020
    %v1065 = vpack.c.b16 %v1025, %v1021
    %v1066 = vpack.c.b16 %v1030, %v1026
    %v1067 = vpack.c.b16 %v1031, %v1027
    %v1068 = vpack.c.b16 %v1032, %v1028
    %v1069 = vpack.c.b16 %v1033, %v1029
    %v1070 = vpack.c.b16 %v1038, %v1034
    %v1071 = vpack.c.b16 %v1039, %v1035
    %v1072 = vpack.c.b16 %v1040, %v1036
    %v1073 = vpack.c.b16 %v1041, %v1037
    %1106 = vmatprep.subr.bf16.mxu0 %v1043
    %1107 = vmatpush1.bf16.msra.mxu0 %v1042
    %1108 = vmatprep.subr.bf16.mxu0 %v1047
    %1109 = vmatpush1.bf16.msra.mxu0 %v1046
    %1110 = vmatprep.subr.bf16.mxu0 %v1051
    %1111 = vmatpush1.bf16.msra.mxu0 %v1050
    %1112 = vmatprep.subr.bf16.mxu0 %v1055
    %1113 = vmatpush1.bf16.msra.mxu0 %v1054
    %1114 = vmatprep.subr.bf16.mxu0 %v1059
    %1115 = vmatpush1.bf16.msra.mxu0 %v1058
    %1116 = vmatprep.subr.bf16.mxu0 %v1063
    %1117 = vmatpush1.bf16.msra.mxu0 %v1062
    %1118 = vmatprep.subr.bf16.mxu0 %v1067
    %1119 = vmatpush1.bf16.msra.mxu0 %v1066
    %1120 = vmatprep.subr.bf16.mxu0 %v1071
    %1121 = vmatpush1.bf16.msra.mxu0 %v1070
    %1122 = vmatprep.subr.bf16.mxu0 0
    %1123 = vmatpush1.bf16.msra.mxu0 0
    %1124 = vmatprep.subr.bf16.mxu0 0
    %1125 = vmatpush1.bf16.msra.mxu0 0
    %1126 = vmatprep.subr.bf16.mxu0 0
    %1127 = vmatpush1.bf16.msra.mxu0 0
    %1128 = vmatprep.subr.bf16.mxu0 0
    %1129 = vmatpush1.bf16.msra.mxu0 0
    %1130 = vmatprep.subr.bf16.mxu0 0
    %1131 = vmatpush1.bf16.msra.mxu0 0
    %1132 = vmatprep.subr.bf16.mxu0 0
    %1133 = vmatpush1.bf16.msra.mxu0 0
    %1134 = vmatprep.subr.bf16.mxu0 0
    %1135 = vmatpush1.bf16.msra.mxu0 0
    %1136 = vmatprep.subr.bf16.mxu0 0
    %1137 = vmatpush1.bf16.msra.mxu0 0
    %1138 = vmatprep.mubr.bf16.mxu0 0
    %1139 = vmatmul.mubr.bf16.gmra.mrb[0].mxu0 %v913
    %v1140 = vpop.f32.mrb[0].mxu0
    %v1141 = vadd.f32 0.0, %v1140
    %v1142 = vpop.f32.mrb[0].mxu0
    %v1143 = vadd.f32 0.0, %v1142
    %v1144 = vpop.f32.mrb[0].mxu0
    %v1145 = vpop.f32.mrb[0].mxu0
    %1146 = vdwg.mxu0
    %1147 = vmatprep.subr.bf16.mxu0 %v1045
    %1148 = vmatpush1.bf16.msra.mxu0 %v1044
    %1149 = vmatprep.subr.bf16.mxu0 %v1049
    %1150 = vmatpush1.bf16.msra.mxu0 %v1048
    %1151 = vmatprep.subr.bf16.mxu0 %v1053
    %1152 = vmatpush1.bf16.msra.mxu0 %v1052
    %1153 = vmatprep.subr.bf16.mxu0 %v1057
    %1154 = vmatpush1.bf16.msra.mxu0 %v1056
    %1155 = vmatprep.subr.bf16.mxu0 %v1061
    %1156 = vmatpush1.bf16.msra.mxu0 %v1060
    %1157 = vmatprep.subr.bf16.mxu0 %v1065
    %1158 = vmatpush1.bf16.msra.mxu0 %v1064
    %1159 = vmatprep.subr.bf16.mxu0 %v1069
    %1160 = vmatpush1.bf16.msra.mxu0 %v1068
    %1161 = vmatprep.subr.bf16.mxu0 %v1073
    %1162 = vmatpush1.bf16.msra.mxu0 %v1072
    %1163 = vmatprep.subr.bf16.mxu0 0
    %1164 = vmatpush1.bf16.msra.mxu0 0
    %1165 = vmatprep.subr.bf16.mxu0 0
    %1166 = vmatpush1.bf16.msra.mxu0 0
    %1167 = vmatprep.subr.bf16.mxu0 0
    %1168 = vmatpush1.bf16.msra.mxu0 0
    %1169 = vmatprep.subr.bf16.mxu0 0
    %1170 = vmatpush1.bf16.msra.mxu0 0
    %1171 = vmatprep.subr.bf16.mxu0 0
    %1172 = vmatpush1.bf16.msra.mxu0 0
    %1173 = vmatprep.subr.bf16.mxu0 0
    %1174 = vmatpush1.bf16.msra.mxu0 0
    %1175 = vmatprep.subr.bf16.mxu0 0
    %1176 = vmatpush1.bf16.msra.mxu0 0
    %1177 = vmatprep.subr.bf16.mxu0 0
    %1178 = vmatpush1.bf16.msra.mxu0 0
    %1179 = vmatprep.mubr.bf16.mxu0 0
    %1180 = vmatmul.mubr.bf16.gmra.mrb[0].mxu0 %v913
    %v1181 = vpop.f32.mrb[0].mxu0
    %v1182 = vadd.f32 0.0, %v1181
    %v1183 = vpop.f32.mrb[0].mxu0
    %v1184 = vadd.f32 0.0, %v1183
    %v1185 = vpop.f32.mrb[0].mxu0
    %v1186 = vpop.f32.mrb[0].mxu0
    %1187 = vdwg.mxu0
    %v1220 = vunpack.c.l.b16 %v881
    %v1221 = vunpack.c.h.b16 %v881
    %v1222 = vunpack.c.l.b16 %v882
    %v1223 = vunpack.c.h.b16 %v882
    %v1224 = vunpack.c.l.b16 %v883
    %v1225 = vunpack.c.h.b16 %v883
    %v1226 = vunpack.c.l.b16 %v884
    %v1227 = vunpack.c.h.b16 %v884
    %v1228 = vunpack.c.l.b16 %v885
    %v1229 = vunpack.c.h.b16 %v885
    %v1230 = vunpack.c.l.b16 %v886
    %v1231 = vunpack.c.h.b16 %v886
    %v1232 = vunpack.c.l.b16 %v887
    %v1233 = vunpack.c.h.b16 %v887
    %v1234 = vunpack.c.l.b16 %v888
    %v1235 = vunpack.c.h.b16 %v888
    %v1236 = vunpack.c.l.b16 %v889
    %v1237 = vunpack.c.h.b16 %v889
    %v1238 = vunpack.c.l.b16 %v890
    %v1239 = vunpack.c.h.b16 %v890
    %v1240 = vunpack.c.l.b16 %v891
    %v1241 = vunpack.c.h.b16 %v891
    %v1242 = vunpack.c.l.b16 %v892
    %v1243 = vunpack.c.h.b16 %v892
    %v1244 = vunpack.c.l.b16 %v893
    %v1245 = vunpack.c.h.b16 %v893
    %v1246 = vunpack.c.l.b16 %v894
    %v1247 = vunpack.c.h.b16 %v894
    %v1248 = vunpack.c.l.b16 %v895
    %v1249 = vunpack.c.h.b16 %v895
    %v1250 = vunpack.c.l.b16 %v896
    %v1251 = vunpack.c.h.b16 %v896
    %v1252 = vunpack.c.l.b16 %v897
    %v1253 = vunpack.c.h.b16 %v897
    %v1254 = vunpack.c.l.b16 %v898
    %v1255 = vunpack.c.h.b16 %v898
    %v1256 = vunpack.c.l.b16 %v899
    %v1257 = vunpack.c.h.b16 %v899
    %v1258 = vunpack.c.l.b16 %v900
    %v1259 = vunpack.c.h.b16 %v900
    %v1260 = vunpack.c.l.b16 %v901
    %v1261 = vunpack.c.h.b16 %v901
    %v1262 = vunpack.c.l.b16 %v902
    %v1263 = vunpack.c.h.b16 %v902
    %v1264 = vunpack.c.l.b16 %v903
    %v1265 = vunpack.c.h.b16 %v903
    %v1266 = vunpack.c.l.b16 %v904
    %v1267 = vunpack.c.h.b16 %v904
    %v1268 = vunpack.c.l.b16 %v905
    %v1269 = vunpack.c.h.b16 %v905
    %v1270 = vunpack.c.l.b16 %v906
    %v1271 = vunpack.c.h.b16 %v906
    %v1272 = vunpack.c.l.b16 %v907
    %v1273 = vunpack.c.h.b16 %v907
    %v1274 = vunpack.c.l.b16 %v908
    %v1275 = vunpack.c.h.b16 %v908
    %v1276 = vunpack.c.l.b16 %v909
    %v1277 = vunpack.c.h.b16 %v909
    %v1278 = vunpack.c.l.b16 %v910
    %v1279 = vunpack.c.h.b16 %v910
    %v1280 = vunpack.c.l.b16 %v911
    %v1281 = vunpack.c.h.b16 %v911
    %v1282 = vunpack.c.l.b16 %v912
    %v1283 = vunpack.c.h.b16 %v912
    %v1284 = vpack.c.b16 %v1224, %v1220
    %v1285 = vpack.c.b16 %v1225, %v1221
    %v1286 = vpack.c.b16 %v1226, %v1222
    %v1287 = vpack.c.b16 %v1227, %v1223
    %v1288 = vpack.c.b16 %v1232, %v1228
    %v1289 = vpack.c.b16 %v1233, %v1229
    %v1290 = vpack.c.b16 %v1234, %v1230
    %v1291 = vpack.c.b16 %v1235, %v1231
    %v1292 = vpack.c.b16 %v1240, %v1236
    %v1293 = vpack.c.b16 %v1241, %v1237
    %v1294 = vpack.c.b16 %v1242, %v1238
    %v1295 = vpack.c.b16 %v1243, %v1239
    %v1296 = vpack.c.b16 %v1248, %v1244
    %v1297 = vpack.c.b16 %v1249, %v1245
    %v1298 = vpack.c.b16 %v1250, %v1246
    %v1299 = vpack.c.b16 %v1251, %v1247
    %v1300 = vpack.c.b16 %v1256, %v1252
    %v1301 = vpack.c.b16 %v1257, %v1253
    %v1302 = vpack.c.b16 %v1258, %v1254
    %v1303 = vpack.c.b16 %v1259, %v1255
    %v1304 = vpack.c.b16 %v1264, %v1260
    %v1305 = vpack.c.b16 %v1265, %v1261
    %v1306 = vpack.c.b16 %v1266, %v1262
    %v1307 = vpack.c.b16 %v1267, %v1263
    %v1308 = vpack.c.b16 %v1272, %v1268
    %v1309 = vpack.c.b16 %v1273, %v1269
    %v1310 = vpack.c.b16 %v1274, %v1270
    %v1311 = vpack.c.b16 %v1275, %v1271
    %v1312 = vpack.c.b16 %v1280, %v1276
    %v1313 = vpack.c.b16 %v1281, %v1277
    %v1314 = vpack.c.b16 %v1282, %v1278
    %v1315 = vpack.c.b16 %v1283, %v1279
    %1348 = vmatprep.subr.bf16.mxu0 %v1285
    %1349 = vmatpush1.bf16.msra.mxu0 %v1284
    %1350 = vmatprep.subr.bf16.mxu0 %v1289
    %1351 = vmatpush1.bf16.msra.mxu0 %v1288
    %1352 = vmatprep.subr.bf16.mxu0 %v1293
    %1353 = vmatpush1.bf16.msra.mxu0 %v1292
    %1354 = vmatprep.subr.bf16.mxu0 %v1297
    %1355 = vmatpush1.bf16.msra.mxu0 %v1296
    %1356 = vmatprep.subr.bf16.mxu0 %v1301
    %1357 = vmatpush1.bf16.msra.mxu0 %v1300
    %1358 = vmatprep.subr.bf16.mxu0 %v1305
    %1359 = vmatpush1.bf16.msra.mxu0 %v1304
    %1360 = vmatprep.subr.bf16.mxu0 %v1309
    %1361 = vmatpush1.bf16.msra.mxu0 %v1308
    %1362 = vmatprep.subr.bf16.mxu0 %v1313
    %1363 = vmatpush1.bf16.msra.mxu0 %v1312
    %1364 = vmatprep.subr.bf16.mxu0 0
    %1365 = vmatpush1.bf16.msra.mxu0 0
    %1366 = vmatprep.subr.bf16.mxu0 0
    %1367 = vmatpush1.bf16.msra.mxu0 0
    %1368 = vmatprep.subr.bf16.mxu0 0
    %1369 = vmatpush1.bf16.msra.mxu0 0
    %1370 = vmatprep.subr.bf16.mxu0 0
    %1371 = vmatpush1.bf16.msra.mxu0 0
    %1372 = vmatprep.subr.bf16.mxu0 0
    %1373 = vmatpush1.bf16.msra.mxu0 0
    %1374 = vmatprep.subr.bf16.mxu0 0
    %1375 = vmatpush1.bf16.msra.mxu0 0
    %1376 = vmatprep.subr.bf16.mxu0 0
    %1377 = vmatpush1.bf16.msra.mxu0 0
    %1378 = vmatprep.subr.bf16.mxu0 0
    %1379 = vmatpush1.bf16.msra.mxu0 0
    %1380 = vmatprep.mubr.bf16.mxu0 0
    %1381 = vmatmul.mubr.bf16.gmra.mrb[0].mxu0 %v876
    %v1382 = vpop.f32.mrb[0].mxu0
    %v1383 = vadd.f32 %v1141, %v1382
    %v1384 = vpop.f32.mrb[0].mxu0
    %v1385 = vadd.f32 %v1143, %v1384
    %v1386 = vpop.f32.mrb[0].mxu0
    %v1387 = vpop.f32.mrb[0].mxu0
    %1388 = vdwg.mxu0
    %1389 = vmatprep.subr.bf16.mxu0 %v1287
    %1390 = vmatpush1.bf16.msra.mxu0 %v1286
    %1391 = vmatprep.subr.bf16.mxu0 %v1291
    %1392 = vmatpush1.bf16.msra.mxu0 %v1290
    %1393 = vmatprep.subr.bf16.mxu0 %v1295
    %1394 = vmatpush1.bf16.msra.mxu0 %v1294
    %1395 = vmatprep.subr.bf16.mxu0 %v1299
    %1396 = vmatpush1.bf16.msra.mxu0 %v1298
    %1397 = vmatprep.subr.bf16.mxu0 %v1303
    %1398 = vmatpush1.bf16.msra.mxu0 %v1302
    %1399 = vmatprep.subr.bf16.mxu0 %v1307
    %1400 = vmatpush1.bf16.msra.mxu0 %v1306
    %1401 = vmatprep.subr.bf16.mxu0 %v1311
    %1402 = vmatpush1.bf16.msra.mxu0 %v1310
    %1403 = vmatprep.subr.bf16.mxu0 %v1315
    %1404 = vmatpush1.bf16.msra.mxu0 %v1314
    %1405 = vmatprep.subr.bf16.mxu0 0
    %1406 = vmatpush1.bf16.msra.mxu0 0
    %1407 = vmatprep.subr.bf16.mxu0 0
    %1408 = vmatpush1.bf16.msra.mxu0 0
    %1409 = vmatprep.subr.bf16.mxu0 0
    %1410 = vmatpush1.bf16.msra.mxu0 0
    %1411 = vmatprep.subr.bf16.mxu0 0
    %1412 = vmatpush1.bf16.msra.mxu0 0
    %1413 = vmatprep.subr.bf16.mxu0 0
    %1414 = vmatpush1.bf16.msra.mxu0 0
    %1415 = vmatprep.subr.bf16.mxu0 0
    %1416 = vmatpush1.bf16.msra.mxu0 0
    %1417 = vmatprep.subr.bf16.mxu0 0
    %1418 = vmatpush1.bf16.msra.mxu0 0
    %1419 = vmatprep.subr.bf16.mxu0 0
    %1420 = vmatpush1.bf16.msra.mxu0 0
    %1421 = vmatprep.mubr.bf16.mxu0 0
    %1422 = vmatmul.mubr.bf16.gmra.mrb[0].mxu0 %v876
    %v1423 = vpop.f32.mrb[0].mxu0
    %v1424 = vadd.f32 %v1182, %v1423
    %v1425 = vpop.f32.mrb[0].mxu0
    %v1426 = vadd.f32 %v1184, %v1425
    %v1427 = vpop.f32.mrb[0].mxu0
    %v1428 = vpop.f32.mrb[0].mxu0
    %1429 = vdwg.mxu0
    %v1430 = vld [vmem:[#allocation15] sm:$0xf]
    %v1432 = vlaneseq
    %v1433 = vshrl.u32 %v1432, 7
    %v1434 = vsub.s32 0, %v1433
    %v1435 = vrot.slane %v1430, %v1434
    %v1436 = vlaneseq
    %v1437 = vshrl.u32 %v1436, 7
    %v1438 = vsub.s32 1, %v1437
    %v1439 = vrot.slane %v1430, %v1438
    %v1440 = vlaneseq
    %v1441 = vshrl.u32 %v1440, 7
    %v1442 = vsub.s32 2, %v1441
    %v1443 = vrot.slane %v1430, %v1442
    %v1444 = vlaneseq
    %v1445 = vshrl.u32 %v1444, 7
    %v1446 = vsub.s32 3, %v1445
    %v1447 = vrot.slane %v1430, %v1446
    %v1452 = vadd.f32 %v1383, %v1435
    %v1453 = vadd.f32 %v1385, %v1439
    %v1454 = vadd.f32 %v1424, %v1443
    %v1455 = vadd.f32 %v1426, %v1447
    %v1456 = vxor.u32 %v1452, 2147483648
    %v1457 = vmul.f32 %v1456, 1.442695
    %v1458 = vpow.pop %v1457
    %v1459 = vadd.f32 %v1458, 1.0
    %v1460 = vrcp.pop %v1459
    %v1461 = vmul.f32 1.0, %v1460
    %v1462 = vxor.u32 %v1453, 2147483648
    %v1463 = vmul.f32 %v1462, 1.442695
    %v1464 = vpow.pop %v1463
    %v1465 = vadd.f32 %v1464, 1.0
    %v1466 = vrcp.pop %v1465
    %v1467 = vmul.f32 1.0, %v1466
    %v1468 = vtanh.pop %v1454
    %v1469 = vxor.u32 %v1455, 2147483648
    %v1470 = vmul.f32 %v1469, 1.442695
    %v1471 = vpow.pop %v1470
    %v1472 = vadd.f32 %v1471, 1.0
    %v1473 = vrcp.pop %v1472
    %v1474 = vmul.f32 1.0, %v1473
    %v1475 = vmul.f32 %v1467, %v880
    %v1476 = vmul.f32 %v1461, %v1468
    %v1477 = vadd.f32 %v1475, %v1476
    %v1478 = vtanh.pop %v1477
    %v1479 = vmul.f32 %v1474, %v1478
    %s1480 = scalar_lea.vmem [#allocation18], 8
    %1481 = vst [vmem:[%s1480] sm:$0xff] %v1479
    %s1482 = scalar_lea.vmem [#allocation20], 8
    %1483 = vst [vmem:[%s1482] sm:$0xff] %v1477
    %v1484 = vpack.c.bf16 %v1479, %v1479
    %1485 = vst [vmem:[#allocation17] sm:$0xf] %v1484
    // Predicated region
    $region98: #{tpu_custom_call.1} parent=1 // pred_check
      _
    $region99: #{tpu_custom_call.1} parent=1 // pred_check_branch
      %1487 = sbr.rel (0) target = $region101
    $region100: #{tpu_custom_call.1} parent=1 // pred_region
      %s1489 = ssub.s32 64, 64
      %1490 = vsyncadd [#allocation6], %s1489
      %s1492 = sshll.u32 [#allocation17], 4
      %s1493 = int_to_ptr.vmem [resolvable:$true] %s1492
      %1495 = dma.vmem_to_hbm [thread:$0]  %s1493, 64, %s10, [#allocation6]
    $region101: #{tpu_custom_call.1} parent=1 // pred_fallthru
      _
    // Predicated region
    $region102: #{tpu_custom_call.1} parent=1 // pred_check
      _
    $region103: #{tpu_custom_call.1} parent=1 // pred_check_branch
      %1497 = sbr.rel (0) target = $region105
    $region104: #{tpu_custom_call.1} parent=1 // pred_region
      %s1499 = ssub.s32 256, 256
      %1500 = vsyncadd [#allocation19], %s1499
      %s1501 = sshll.u32 [#allocation18], 4
      %s1502 = int_to_ptr.vmem [resolvable:$true] %s1501
      %1507 = dma.vmem_to_hbm [thread:$0]  %s1502, 256, %s11, [#allocation19], 128, 128, 8
    $region105: #{tpu_custom_call.1} parent=1 // pred_fallthru
      _
    // Predicated region
    $region106: #{tpu_custom_call.1} parent=1 // pred_check
      _
    $region107: #{tpu_custom_call.1} parent=1 // pred_check_branch
      %1509 = sbr.rel (0) target = $region109
    $region108: #{tpu_custom_call.1} parent=1 // pred_region
      %s1511 = ssub.s32 256, 256
      %1512 = vsyncadd [#allocation19], %s1511
      %s1513 = sshll.u32 [#allocation20], 4
      %s1514 = int_to_ptr.vmem [resolvable:$true] %s1513
      %1519 = dma.vmem_to_hbm [thread:$0]  %s1514, 256, %s12, [#allocation19], 128, 128, 8
    $region109: #{tpu_custom_call.1} parent=1 // pred_fallthru
      _
    // Predicated region
    $region110: #{tpu_custom_call.1} parent=1 // pred_check
      _
    $region111: #{tpu_custom_call.1} parent=1 // pred_check_branch
      %1521 = sbr.rel (0) target = $region113
    $region112: #{tpu_custom_call.1} parent=1 // pred_region
      %1522 = dma.done [#allocation6], 64
    $region113: #{tpu_custom_call.1} parent=1 // pred_fallthru
      _
    // Predicated region
    $region114: #{tpu_custom_call.1} parent=1 // pred_check
      _
    $region115: #{tpu_custom_call.1} parent=1 // pred_check_branch
      %1524 = sbr.rel (0) target = $region117
    $region116: #{tpu_custom_call.1} parent=1 // pred_region
      %1525 = dma.done [#allocation19], 256
    $region117: #{tpu_custom_call.1} parent=1 // pred_fallthru
      _
    // Predicated region
    $region118: #{tpu_custom_call.1} parent=1 // pred_check
      _
    $region119: #{tpu_custom_call.1} parent=1 // pred_check_branch
      %1527 = sbr.rel (0) target = $region121
    $region120: #{tpu_custom_call.1} parent=1 // pred_region
      %1528 = dma.done [#allocation19], 256
    $region121: #{tpu_custom_call.1} parent=1 // pred_fallthru
      _
    %1529 = vsyncpa [#allocation5], 1
    %1530 = vsyncpa [#allocation10], 1
    %1531 = vsyncpa [#allocation13], 1
    %1532 = vsyncpa [#allocation16], 1
    %1533 = vsyncpa [#allocation6], 1
    %1534 = vsyncpa [#allocation19], 1
    %1535 = vsyncpa [#allocation7], 1
  %1536 = vsyncmov [#allocation3]
  %s1537 = vpop.sfrf %1536
  %p1538 = scmp.eq.s32.totalorder %s1537, 0
  %p1539 = pneg %p1538
  %1541 = shalt.err (%p1539)
  %s1542 = scalar_lea.sflag [#allocation3], 1
  %1543 = vsyncmov %s1542
  %s1544 = vpop.sfrf %1543
  %p1545 = scmp.eq.s32.totalorder %s1544, 0
  %p1546 = pneg %p1545
  %1548 = shalt.err (%p1546)
  %s1549 = scalar_lea.sflag [#allocation3], 2
  %1550 = vsyncmov %s1549
  %s1551 = vpop.sfrf %1550
  %p1552 = scmp.eq.s32.totalorder %s1551, 0
  %p1553 = pneg %p1552
  %1555 = shalt.err (%p1553)
  %s1556 = scalar_lea.sflag [#allocation3], 3
  %1557 = vsyncmov %s1556
  %s1558 = vpop.sfrf %1557
  %p1559 = scmp.eq.s32.totalorder %s1558, 0
  %p1560 = pneg %p1559
  %1562 = shalt.err (%p1560)
  %s1563 = scalar_lea.sflag [#allocation3], 4
  %1564 = vsyncmov %s1563
  %s1565 = vpop.sfrf %1564
  %p1566 = scmp.eq.s32.totalorder %s1565, 0
  %p1567 = pneg %p1566
  %1569 = shalt.err (%p1567)
  %s1570 = scalar_lea.sflag [#allocation3], 5
  %1571 = vsyncmov %s1570
  %s1572 = vpop.sfrf %1571
  %p1573 = scmp.eq.s32.totalorder %s1572, 0
  %p1574 = pneg %p1573
  %1576 = shalt.err (%p1574)
  %s1577 = scalar_lea.sflag [#allocation3], 6
  %1578 = vsyncmov %s1577
  %s1579 = vpop.sfrf %1578
  %p1580 = scmp.eq.s32.totalorder %s1579, 0
  %p1581 = pneg %p1580
  %1583 = shalt.err (%p1581)
  %s1584 = scalar_lea.sflag [#allocation3], 7
  %1585 = vsyncmov %s1584
  %s1586 = vpop.sfrf %1585
  %p1587 = scmp.eq.s32.totalorder %s1586, 0
  %p1588 = pneg %p1587
  %1590 = shalt.err (%p1588)

</llo_original>
